<compile_context>
chip_gen: v5e
topology: v5e:2x2
jax: 0.10.0
libtpu: 0.0.40
codegen_flags: <defaults>
</compile_context>

<pallas_src>
import functools  # noqa: F401  (kept for parity with typical kernel wrappers)

import jax
import jax.numpy as jnp
from jax.experimental import pallas as pl
from jax.experimental.pallas import tpu as pltpu


# ----------------------------------------------------------------------------
# Fused Pallas kernel: conv1 -> conv2 -> conv3 -> fused heads, all in VMEM.
# Specialized to the 4x36x36 input geometry (conv output is 64 x 1 x 1).
# ----------------------------------------------------------------------------
def _fused_forward_kernel(s2d_ref, w1_ref, b1_ref, w2_ref, b2_ref, w3_ref,
                          b3_ref, wh1_ref, bh1_ref, wh2_ref, bh2_ref, out_ref):
    """s2d_ref : (B, 9, 9, 64)  space-to-depth(4) of the (B, 36, 36, 4) input
       w1_ref  : (4, 64, 32)    conv1 weights, one (64, 32) matrix per 2x2 tap
       w2_ref  : (16, 32, 64)   conv2 weights, one (32, 64) matrix per 4x4 tap
       w3_ref  : (9, 64, 64)    conv3 weights, one (64, 64) matrix per 3x3 tap
       wh1_ref : (64, 768)      concat of the three head first layers
       wh2_ref : (768, A+2)     block-diagonal head second layers
       out_ref : (B, A+2)       [actor | v_ext | v_int]
    """
    f32 = jnp.float32
    B = s2d_ref.shape[0]
    s2d = s2d_ref[...]

    # conv1 (8x8, stride 4) == 2x2 stride-1 conv on the space-to-depth input.
    acc1 = jnp.zeros((B * 64, 32), f32)
    for bi in range(2):
        for bj in range(2):
            lhs = s2d[:, bi:bi + 8, bj:bj + 8, :].reshape(B * 64, 64)
            acc1 = acc1 + jnp.dot(lhs, w1_ref[bi * 2 + bj],
                                  preferred_element_type=f32)
    act1 = jnp.maximum(acc1 + b1_ref[...], 0.0).reshape(B, 8, 8, 32)

    # conv2 (4x4, stride 2) computed as a stride-1 conv over a width-padded
    # input: padding the W axis 8 -> 16 keeps every tap a contiguous slice of
    # shape (B, 5, 8, 32), so all reshapes stay sublane-aligned.  Only the
    # even (row, col) positions of the stride-1 result are read downstream.
    act1p = jnp.concatenate(
        [act1, jnp.zeros((B, 8, 8, 32), f32)], axis=2)          # (B, 8, 16, 32)
    acc2 = jnp.zeros((B * 5 * 8, 64), f32)
    for i in range(4):
        for j in range(4):
            lhs = act1p[:, i:i + 5, j:j + 8, :].reshape(B * 40, 32)
            acc2 = acc2 + jnp.dot(lhs, w2_ref[i * 4 + j],
                                  preferred_element_type=f32)
    act2 = jnp.maximum(acc2 + b2_ref[...], 0.0).reshape(B, 5, 8, 64)

    # conv3 (3x3, stride 1 on the 3x3 map, output 1x1) == dense layer over the
    # nine valid (even-indexed) conv2 positions.
    acc3 = jnp.zeros((B, 64), f32)
    for i in range(3):
        for j in range(3):
            acc3 = acc3 + jnp.dot(act2[:, 2 * i, 2 * j, :], w3_ref[i * 3 + j],
                                  preferred_element_type=f32)
    flat = jnp.maximum(acc3 + b3_ref[...], 0.0)                 # (B, 64)

    # Fused heads: actor / critic_ext / critic_int in one pair of matmuls.
    z = jnp.maximum(jnp.dot(flat, wh1_ref[...], preferred_element_type=f32)
                    + bh1_ref[...], 0.0)                        # (B, 768)
    out_ref[...] = (jnp.dot(z, wh2_ref[...], preferred_element_type=f32)
                    + bh2_ref[...])


# ----------------------------------------------------------------------------
# Parameter init (deterministic, PyTorch-like uniform(-1/sqrt(fan_in), ...))
# ----------------------------------------------------------------------------
def _init_conv(key, oc, ic, kh, kw):
    k1, k2 = jax.random.split(key)
    bound = 1.0 / float(jnp.sqrt(ic * kh * kw))
    w = jax.random.uniform(k1, (oc, ic, kh, kw), jnp.float32, -bound, bound)
    b = jax.random.uniform(k2, (oc,), jnp.float32, -bound, bound)
    return w, b


def _init_linear(key, out_f, in_f):
    k1, k2 = jax.random.split(key)
    bound = 1.0 / float(jnp.sqrt(in_f))
    w = jax.random.uniform(k1, (out_f, in_f), jnp.float32, -bound, bound)
    b = jax.random.uniform(k2, (out_f,), jnp.float32, -bound, bound)
    return w, b


def init_params(key, input_shape, n_actions, conv_out_size):
    ks = jax.random.split(key, 9)
    p = {}
    p["c1_w"], p["c1_b"] = _init_conv(ks[0], 32, input_shape[0], 8, 8)
    p["c2_w"], p["c2_b"] = _init_conv(ks[1], 64, 32, 4, 4)
    p["c3_w"], p["c3_b"] = _init_conv(ks[2], 64, 64, 3, 3)
    p["a1_w"], p["a1_b"] = _init_linear(ks[3], 256, conv_out_size)
    p["a2_w"], p["a2_b"] = _init_linear(ks[4], n_actions, 256)
    p["ce1_w"], p["ce1_b"] = _init_linear(ks[5], 256, conv_out_size)
    p["ce2_w"], p["ce2_b"] = _init_linear(ks[6], 1, 256)
    p["ci1_w"], p["ci1_b"] = _init_linear(ks[7], 256, conv_out_size)
    p["ci2_w"], p["ci2_b"] = _init_linear(ks[8], 1, 256)
    return p


# ----------------------------------------------------------------------------
# One-time parameter re-layout for the fused kernel (hoisted out of forward).
# ----------------------------------------------------------------------------
def prepare_params(params, n_actions):
    # conv1: fold the x/256 scaling into the weights (exact: power-of-two) and
    # split the 8x8/stride-4 kernel into four 4x4 sub-taps matching the
    # space-to-depth(4) input, feature order (ri, rj, c).
    w1 = params["c1_w"] / 256.0                                   # (32, 4, 8, 8)
    w1_taps = []
    for bi in range(2):
        for bj in range(2):
            sub = w1[:, :, 4 * bi:4 * bi + 4, 4 * bj:4 * bj + 4]  # (oc,c,ri,rj)
            w1_taps.append(sub.transpose(2, 3, 1, 0).reshape(64, 32))
    w1_taps = jnp.stack(w1_taps)                                  # (4, 64, 32)

    w2_taps = params["c2_w"].transpose(2, 3, 1, 0).reshape(16, 32, 64)
    w3_taps = params["c3_w"].transpose(2, 3, 1, 0).reshape(9, 64, 64)

    # heads: first layers concatenated along N, second layers block-diagonal.
    wh1 = jnp.concatenate(
        [params["a1_w"].T, params["ce1_w"].T, params["ci1_w"].T], axis=1)
    bh1 = jnp.concatenate(
        [params["a1_b"], params["ce1_b"], params["ci1_b"]]).reshape(1, -1)
    n_out = n_actions + 2
    wh2 = jnp.zeros((3 * 256, n_out), jnp.float32)
    wh2 = wh2.at[0:256, 0:n_actions].set(params["a2_w"].T)
    wh2 = wh2.at[256:512, n_actions:n_actions + 1].set(params["ce2_w"].T)
    wh2 = wh2.at[512:768, n_actions + 1:n_out].set(params["ci2_w"].T)
    bh2 = jnp.concatenate(
        [params["a2_b"], params["ce2_b"], params["ci2_b"]]).reshape(1, -1)

    return {
        "w1": w1_taps, "b1": params["c1_b"].reshape(1, -1),
        "w2": w2_taps, "b2": params["c2_b"].reshape(1, -1),
        "w3": w3_taps, "b3": params["c3_b"].reshape(1, -1),
        "wh1": wh1, "bh1": bh1, "wh2": wh2, "bh2": bh2,
    }


# ----------------------------------------------------------------------------
# Forward pass (matches AtariDistillPPO.forward)
# ----------------------------------------------------------------------------
@jax.jit
def forward(prep, x_u8):
    """x_u8: (B, 4, 36, 36) uint8 -> (actor (B, A), v_ext (B, 1), v_int (B, 1))."""
    B, C, H, W = x_u8.shape
    # TODO(synk): the kernel is specialized to the 4x36x36 geometry (conv out
    # is 64x1x1); other input sizes need re-derived slice/tap constants, and
    # real throughput on v5e/v6e/v7x needs a much larger batch to fill the MXU.
    assert (C, H, W) == (4, 36, 36), "kernel specialized to 4x36x36 inputs"
    n_out = prep["wh2"].shape[1]
    n_actions = n_out - 2

    # Boundary-only data prep: float cast (the /256 lives in the conv1
    # weights) + NCHW->NHWC + space-to-depth(4) which absorbs conv1's stride.
    x = x_u8.astype(jnp.float32).transpose(0, 2, 3, 1)            # (B, 36, 36, 4)
    s2d = (x.reshape(B, 9, 4, 9, 4, 4)
            .transpose(0, 1, 3, 2, 4, 5)
            .reshape(B, 9, 9, 64))

    in_specs = [pl.BlockSpec(memory_space=pltpu.MemorySpace.VMEM)
                for _ in range(11)]
    out = pl.pallas_call(
        _fused_forward_kernel,
        out_shape=jax.ShapeDtypeStruct((B, n_out), jnp.float32),
        in_specs=in_specs,
        out_specs=pl.BlockSpec(memory_space=pltpu.MemorySpace.VMEM),
    )(s2d, prep["w1"], prep["b1"], prep["w2"], prep["b2"], prep["w3"],
      prep["b3"], prep["wh1"], prep["bh1"], prep["wh2"], prep["bh2"])

    actor = out[:, :n_actions]
    v_ext = out[:, n_actions:n_actions + 1]
    v_int = out[:, n_actions + 1:n_actions + 2]
    return actor, v_ext, v_int


# ----------------------------------------------------------------------------
# Pure-JAX reference (independent correctness check for the Pallas path)
# ----------------------------------------------------------------------------
def reference(params, x_u8):
    fx = x_u8.astype(jnp.float32) / 256.0

    def conv(x, w, b, s):
        y = jax.lax.conv_general_dilated(
            x, w, (s, s), "VALID", dimension_numbers=("NCHW", "OIHW", "NCHW"))
        return jax.nn.relu(y + b[None, :, None, None])

    h = conv(fx, params["c1_w"], params["c1_b"], 4)
    h = conv(h, params["c2_w"], params["c2_b"], 2)
    h = conv(h, params["c3_w"], params["c3_b"], 1)
    flat = h.reshape(h.shape[0], -1)

    def head(w1, b1, w2, b2):
        return jax.nn.relu(flat @ w1.T + b1) @ w2.T + b2

    return (head(params["a1_w"], params["a1_b"], params["a2_w"], params["a2_b"]),
            head(params["ce1_w"], params["ce1_b"], params["ce2_w"], params["ce2_b"]),
            head(params["ci1_w"], params["ci1_b"], params["ci2_w"], params["ci2_b"]))


if __name__ == "__main__":
    # Small Atari-like config: 4 stacked frames of 36x36 (36 -> 8 -> 3 -> 1
    # through the 8/4, 4/2, 3/1 conv stack), so conv_out_size = 64.
    B, C, H, W = 2, 4, 36, 36
    n_actions = 6
    conv_out_size = 64 * 1 * 1

    key = jax.random.PRNGKey(0)
    k_params, k_x = jax.random.split(key)
    params = init_params(k_params, (C, H, W), n_actions, conv_out_size)
    prep = prepare_params(params, n_actions)
    x = jax.random.randint(k_x, (B, C, H, W), 0, 256, dtype=jnp.int32).astype(jnp.uint8)

    actor, v_ext, v_int = jax.block_until_ready(forward(prep, x))
    ref_actor, ref_ext, ref_int = jax.block_until_ready(reference(params, x))

    assert actor.shape == (B, n_actions) and v_ext.shape == (B, 1) and v_int.shape == (B, 1)
    assert jnp.allclose(actor, ref_actor, rtol=1e-4, atol=1e-5), \
        float(jnp.max(jnp.abs(actor - ref_actor)))
    assert jnp.allclose(v_ext, ref_ext, rtol=1e-4, atol=1e-5), \
        float(jnp.max(jnp.abs(v_ext - ref_ext)))
    assert jnp.allclose(v_int, ref_int, rtol=1e-4, atol=1e-5), \
        float(jnp.max(jnp.abs(v_int - ref_int)))

    print("KERNEL_OK")
</pallas_src>

<mosaic_0001>
module attributes {stable_mosaic.version = 11 : i64} {
  func.func @_fused_forward_kernel(%arg0: memref<2x9x9x64xf32, #tpu.memory_space<vmem>>, %arg1: memref<4x64x32xf32, #tpu.memory_space<vmem>>, %arg2: memref<1x32xf32, #tpu.memory_space<vmem>>, %arg3: memref<16x32x64xf32, #tpu.memory_space<vmem>>, %arg4: memref<1x64xf32, #tpu.memory_space<vmem>>, %arg5: memref<9x64x64xf32, #tpu.memory_space<vmem>>, %arg6: memref<1x64xf32, #tpu.memory_space<vmem>>, %arg7: memref<64x768xf32, #tpu.memory_space<vmem>>, %arg8: memref<1x768xf32, #tpu.memory_space<vmem>>, %arg9: memref<768x8xf32, #tpu.memory_space<vmem>>, %arg10: memref<1x8xf32, #tpu.memory_space<vmem>>, %arg11: memref<2x8xf32, #tpu.memory_space<vmem>>) attributes {dimension_semantics = [], scalar_prefetch = 0 : i64, scratch_operands = 0 : i64, tpu.core_type = #tpu.core_type<tc>} {
    %c0 = arith.constant 0 : index
    %c0_0 = arith.constant 0 : index
    %c0_1 = arith.constant 0 : index
    %c0_2 = arith.constant 0 : index
    %0 = vector.load %arg0[%c0, %c0_0, %c0_1, %c0_2] : memref<2x9x9x64xf32, #tpu.memory_space<vmem>>, vector<2x9x9x64xf32>
    %cst = arith.constant 0.000000e+00 : f32
    %1 = vector.broadcast %cst : f32 to vector<128x32xf32>
    %2 = vector.extract_strided_slice %0 {offsets = [0, 0, 0, 0], sizes = [2, 8, 8, 64], strides = [1, 1, 1, 1]} : vector<2x9x9x64xf32> to vector<2x8x8x64xf32>
    %3 = vector.shape_cast %2 : vector<2x8x8x64xf32> to vector<128x64xf32>
    %c0_3 = arith.constant 0 : index
    %c0_4 = arith.constant 0 : index
    %c0_5 = arith.constant 0 : index
    %4 = vector.load %arg1[%c0_3, %c0_4, %c0_5] : memref<4x64x32xf32, #tpu.memory_space<vmem>>, vector<1x64x32xf32>
    %5 = vector.shape_cast %4 : vector<1x64x32xf32> to vector<64x32xf32>
    %cst_6 = arith.constant dense<0.000000e+00> : vector<128x32xf32>
    %6 = tpu.matmul %3, %5, %cst_6 {dimension_numbers = #tpu.dot_dimension_numbers<[1], [0], [0], [1], [0, 0, 1, 1], [], []>} : vector<128x64xf32>, vector<64x32xf32>, vector<128x32xf32> -> vector<128x32xf32>
    %7 = arith.addf %1, %6 : vector<128x32xf32>
    %8 = vector.extract_strided_slice %0 {offsets = [0, 0, 1, 0], sizes = [2, 8, 8, 64], strides = [1, 1, 1, 1]} : vector<2x9x9x64xf32> to vector<2x8x8x64xf32>
    %9 = vector.shape_cast %8 : vector<2x8x8x64xf32> to vector<128x64xf32>
    %c1 = arith.constant 1 : index
    %c0_7 = arith.constant 0 : index
    %c0_8 = arith.constant 0 : index
    %10 = vector.load %arg1[%c1, %c0_7, %c0_8] : memref<4x64x32xf32, #tpu.memory_space<vmem>>, vector<1x64x32xf32>
    %11 = vector.shape_cast %10 : vector<1x64x32xf32> to vector<64x32xf32>
    %cst_9 = arith.constant dense<0.000000e+00> : vector<128x32xf32>
    %12 = tpu.matmul %9, %11, %cst_9 {dimension_numbers = #tpu.dot_dimension_numbers<[1], [0], [0], [1], [0, 0, 1, 1], [], []>} : vector<128x64xf32>, vector<64x32xf32>, vector<128x32xf32> -> vector<128x32xf32>
    %13 = arith.addf %7, %12 : vector<128x32xf32>
    %14 = vector.extract_strided_slice %0 {offsets = [0, 1, 0, 0], sizes = [2, 8, 8, 64], strides = [1, 1, 1, 1]} : vector<2x9x9x64xf32> to vector<2x8x8x64xf32>
    %15 = vector.shape_cast %14 : vector<2x8x8x64xf32> to vector<128x64xf32>
    %c2 = arith.constant 2 : index
    %c0_10 = arith.constant 0 : index
    %c0_11 = arith.constant 0 : index
    %16 = vector.load %arg1[%c2, %c0_10, %c0_11] : memref<4x64x32xf32, #tpu.memory_space<vmem>>, vector<1x64x32xf32>
    %17 = vector.shape_cast %16 : vector<1x64x32xf32> to vector<64x32xf32>
    %cst_12 = arith.constant dense<0.000000e+00> : vector<128x32xf32>
    %18 = tpu.matmul %15, %17, %cst_12 {dimension_numbers = #tpu.dot_dimension_numbers<[1], [0], [0], [1], [0, 0, 1, 1], [], []>} : vector<128x64xf32>, vector<64x32xf32>, vector<128x32xf32> -> vector<128x32xf32>
    %19 = arith.addf %13, %18 : vector<128x32xf32>
    %20 = vector.extract_strided_slice %0 {offsets = [0, 1, 1, 0], sizes = [2, 8, 8, 64], strides = [1, 1, 1, 1]} : vector<2x9x9x64xf32> to vector<2x8x8x64xf32>
    %21 = vector.shape_cast %20 : vector<2x8x8x64xf32> to vector<128x64xf32>
    %c3 = arith.constant 3 : index
    %c0_13 = arith.constant 0 : index
    %c0_14 = arith.constant 0 : index
    %22 = vector.load %arg1[%c3, %c0_13, %c0_14] : memref<4x64x32xf32, #tpu.memory_space<vmem>>, vector<1x64x32xf32>
    %23 = vector.shape_cast %22 : vector<1x64x32xf32> to vector<64x32xf32>
    %cst_15 = arith.constant dense<0.000000e+00> : vector<128x32xf32>
    %24 = tpu.matmul %21, %23, %cst_15 {dimension_numbers = #tpu.dot_dimension_numbers<[1], [0], [0], [1], [0, 0, 1, 1], [], []>} : vector<128x64xf32>, vector<64x32xf32>, vector<128x32xf32> -> vector<128x32xf32>
    %25 = arith.addf %19, %24 : vector<128x32xf32>
    %c0_16 = arith.constant 0 : index
    %c0_17 = arith.constant 0 : index
    %26 = vector.load %arg2[%c0_16, %c0_17] : memref<1x32xf32, #tpu.memory_space<vmem>>, vector<1x32xf32>
    %27 = vector.broadcast %26 : vector<1x32xf32> to vector<128x32xf32>
    %28 = arith.addf %25, %27 : vector<128x32xf32>
    %cst_18 = arith.constant 0.000000e+00 : f32
    %29 = vector.broadcast %cst_18 : f32 to vector<128x32xf32>
    %30 = arith.maximumf %28, %29 : vector<128x32xf32>
    %31 = vector.shape_cast %30 : vector<128x32xf32> to vector<2x8x8x32xf32>
    %cst_19 = arith.constant 0.000000e+00 : f32
    %32 = vector.broadcast %cst_19 : f32 to vector<2x8x8x32xf32>
    %33 = tpu.concatenate %31, %32 in 2 : vector<2x8x8x32xf32>, vector<2x8x8x32xf32> -> vector<2x8x16x32xf32>
    %cst_20 = arith.constant 0.000000e+00 : f32
    %34 = vector.broadcast %cst_20 : f32 to vector<80x64xf32>
    %35 = vector.extract_strided_slice %33 {offsets = [0, 0, 0, 0], sizes = [2, 5, 8, 32], strides = [1, 1, 1, 1]} : vector<2x8x16x32xf32> to vector<2x5x8x32xf32>
    %36 = vector.shape_cast %35 : vector<2x5x8x32xf32> to vector<80x32xf32>
    %c0_21 = arith.constant 0 : index
    %c0_22 = arith.constant 0 : index
    %c0_23 = arith.constant 0 : index
    %37 = vector.load %arg3[%c0_21, %c0_22, %c0_23] : memref<16x32x64xf32, #tpu.memory_space<vmem>>, vector<1x32x64xf32>
    %38 = vector.shape_cast %37 : vector<1x32x64xf32> to vector<32x64xf32>
    %cst_24 = arith.constant dense<0.000000e+00> : vector<80x64xf32>
    %39 = tpu.matmul %36, %38, %cst_24 {dimension_numbers = #tpu.dot_dimension_numbers<[1], [0], [0], [1], [0, 0, 1, 1], [], []>} : vector<80x32xf32>, vector<32x64xf32>, vector<80x64xf32> -> vector<80x64xf32>
    %40 = arith.addf %34, %39 : vector<80x64xf32>
    %41 = vector.extract_strided_slice %33 {offsets = [0, 0, 1, 0], sizes = [2, 5, 8, 32], strides = [1, 1, 1, 1]} : vector<2x8x16x32xf32> to vector<2x5x8x32xf32>
    %42 = vector.shape_cast %41 : vector<2x5x8x32xf32> to vector<80x32xf32>
    %c1_25 = arith.constant 1 : index
    %c0_26 = arith.constant 0 : index
    %c0_27 = arith.constant 0 : index
    %43 = vector.load %arg3[%c1_25, %c0_26, %c0_27] : memref<16x32x64xf32, #tpu.memory_space<vmem>>, vector<1x32x64xf32>
    %44 = vector.shape_cast %43 : vector<1x32x64xf32> to vector<32x64xf32>
    %cst_28 = arith.constant dense<0.000000e+00> : vector<80x64xf32>
    %45 = tpu.matmul %42, %44, %cst_28 {dimension_numbers = #tpu.dot_dimension_numbers<[1], [0], [0], [1], [0, 0, 1, 1], [], []>} : vector<80x32xf32>, vector<32x64xf32>, vector<80x64xf32> -> vector<80x64xf32>
    %46 = arith.addf %40, %45 : vector<80x64xf32>
    %47 = vector.extract_strided_slice %33 {offsets = [0, 0, 2, 0], sizes = [2, 5, 8, 32], strides = [1, 1, 1, 1]} : vector<2x8x16x32xf32> to vector<2x5x8x32xf32>
    %48 = vector.shape_cast %47 : vector<2x5x8x32xf32> to vector<80x32xf32>
    %c2_29 = arith.constant 2 : index
    %c0_30 = arith.constant 0 : index
    %c0_31 = arith.constant 0 : index
    %49 = vector.load %arg3[%c2_29, %c0_30, %c0_31] : memref<16x32x64xf32, #tpu.memory_space<vmem>>, vector<1x32x64xf32>
    %50 = vector.shape_cast %49 : vector<1x32x64xf32> to vector<32x64xf32>
    %cst_32 = arith.constant dense<0.000000e+00> : vector<80x64xf32>
    %51 = tpu.matmul %48, %50, %cst_32 {dimension_numbers = #tpu.dot_dimension_numbers<[1], [0], [0], [1], [0, 0, 1, 1], [], []>} : vector<80x32xf32>, vector<32x64xf32>, vector<80x64xf32> -> vector<80x64xf32>
    %52 = arith.addf %46, %51 : vector<80x64xf32>
    %53 = vector.extract_strided_slice %33 {offsets = [0, 0, 3, 0], sizes = [2, 5, 8, 32], strides = [1, 1, 1, 1]} : vector<2x8x16x32xf32> to vector<2x5x8x32xf32>
    %54 = vector.shape_cast %53 : vector<2x5x8x32xf32> to vector<80x32xf32>
    %c3_33 = arith.constant 3 : index
    %c0_34 = arith.constant 0 : index
    %c0_35 = arith.constant 0 : index
    %55 = vector.load %arg3[%c3_33, %c0_34, %c0_35] : memref<16x32x64xf32, #tpu.memory_space<vmem>>, vector<1x32x64xf32>
    %56 = vector.shape_cast %55 : vector<1x32x64xf32> to vector<32x64xf32>
    %cst_36 = arith.constant dense<0.000000e+00> : vector<80x64xf32>
    %57 = tpu.matmul %54, %56, %cst_36 {dimension_numbers = #tpu.dot_dimension_numbers<[1], [0], [0], [1], [0, 0, 1, 1], [], []>} : vector<80x32xf32>, vector<32x64xf32>, vector<80x64xf32> -> vector<80x64xf32>
    %58 = arith.addf %52, %57 : vector<80x64xf32>
    %59 = vector.extract_strided_slice %33 {offsets = [0, 1, 0, 0], sizes = [2, 5, 8, 32], strides = [1, 1, 1, 1]} : vector<2x8x16x32xf32> to vector<2x5x8x32xf32>
    %60 = vector.shape_cast %59 : vector<2x5x8x32xf32> to vector<80x32xf32>
    %c4 = arith.constant 4 : index
    %c0_37 = arith.constant 0 : index
    %c0_38 = arith.constant 0 : index
    %61 = vector.load %arg3[%c4, %c0_37, %c0_38] : memref<16x32x64xf32, #tpu.memory_space<vmem>>, vector<1x32x64xf32>
    %62 = vector.shape_cast %61 : vector<1x32x64xf32> to vector<32x64xf32>
    %cst_39 = arith.constant dense<0.000000e+00> : vector<80x64xf32>
    %63 = tpu.matmul %60, %62, %cst_39 {dimension_numbers = #tpu.dot_dimension_numbers<[1], [0], [0], [1], [0, 0, 1, 1], [], []>} : vector<80x32xf32>, vector<32x64xf32>, vector<80x64xf32> -> vector<80x64xf32>
    %64 = arith.addf %58, %63 : vector<80x64xf32>
    %65 = vector.extract_strided_slice %33 {offsets = [0, 1, 1, 0], sizes = [2, 5, 8, 32], strides = [1, 1, 1, 1]} : vector<2x8x16x32xf32> to vector<2x5x8x32xf32>
    %66 = vector.shape_cast %65 : vector<2x5x8x32xf32> to vector<80x32xf32>
    %c5 = arith.constant 5 : index
    %c0_40 = arith.constant 0 : index
    %c0_41 = arith.constant 0 : index
    %67 = vector.load %arg3[%c5, %c0_40, %c0_41] : memref<16x32x64xf32, #tpu.memory_space<vmem>>, vector<1x32x64xf32>
    %68 = vector.shape_cast %67 : vector<1x32x64xf32> to vector<32x64xf32>
    %cst_42 = arith.constant dense<0.000000e+00> : vector<80x64xf32>
    %69 = tpu.matmul %66, %68, %cst_42 {dimension_numbers = #tpu.dot_dimension_numbers<[1], [0], [0], [1], [0, 0, 1, 1], [], []>} : vector<80x32xf32>, vector<32x64xf32>, vector<80x64xf32> -> vector<80x64xf32>
    %70 = arith.addf %64, %69 : vector<80x64xf32>
    %71 = vector.extract_strided_slice %33 {offsets = [0, 1, 2, 0], sizes = [2, 5, 8, 32], strides = [1, 1, 1, 1]} : vector<2x8x16x32xf32> to vector<2x5x8x32xf32>
    %72 = vector.shape_cast %71 : vector<2x5x8x32xf32> to vector<80x32xf32>
    %c6 = arith.constant 6 : index
    %c0_43 = arith.constant 0 : index
    %c0_44 = arith.constant 0 : index
    %73 = vector.load %arg3[%c6, %c0_43, %c0_44] : memref<16x32x64xf32, #tpu.memory_space<vmem>>, vector<1x32x64xf32>
    %74 = vector.shape_cast %73 : vector<1x32x64xf32> to vector<32x64xf32>
    %cst_45 = arith.constant dense<0.000000e+00> : vector<80x64xf32>
    %75 = tpu.matmul %72, %74, %cst_45 {dimension_numbers = #tpu.dot_dimension_numbers<[1], [0], [0], [1], [0, 0, 1, 1], [], []>} : vector<80x32xf32>, vector<32x64xf32>, vector<80x64xf32> -> vector<80x64xf32>
    %76 = arith.addf %70, %75 : vector<80x64xf32>
    %77 = vector.extract_strided_slice %33 {offsets = [0, 1, 3, 0], sizes = [2, 5, 8, 32], strides = [1, 1, 1, 1]} : vector<2x8x16x32xf32> to vector<2x5x8x32xf32>
    %78 = vector.shape_cast %77 : vector<2x5x8x32xf32> to vector<80x32xf32>
    %c7 = arith.constant 7 : index
    %c0_46 = arith.constant 0 : index
    %c0_47 = arith.constant 0 : index
    %79 = vector.load %arg3[%c7, %c0_46, %c0_47] : memref<16x32x64xf32, #tpu.memory_space<vmem>>, vector<1x32x64xf32>
    %80 = vector.shape_cast %79 : vector<1x32x64xf32> to vector<32x64xf32>
    %cst_48 = arith.constant dense<0.000000e+00> : vector<80x64xf32>
    %81 = tpu.matmul %78, %80, %cst_48 {dimension_numbers = #tpu.dot_dimension_numbers<[1], [0], [0], [1], [0, 0, 1, 1], [], []>} : vector<80x32xf32>, vector<32x64xf32>, vector<80x64xf32> -> vector<80x64xf32>
    %82 = arith.addf %76, %81 : vector<80x64xf32>
    %83 = vector.extract_strided_slice %33 {offsets = [0, 2, 0, 0], sizes = [2, 5, 8, 32], strides = [1, 1, 1, 1]} : vector<2x8x16x32xf32> to vector<2x5x8x32xf32>
    %84 = vector.shape_cast %83 : vector<2x5x8x32xf32> to vector<80x32xf32>
    %c8 = arith.constant 8 : index
    %c0_49 = arith.constant 0 : index
    %c0_50 = arith.constant 0 : index
    %85 = vector.load %arg3[%c8, %c0_49, %c0_50] : memref<16x32x64xf32, #tpu.memory_space<vmem>>, vector<1x32x64xf32>
    %86 = vector.shape_cast %85 : vector<1x32x64xf32> to vector<32x64xf32>
    %cst_51 = arith.constant dense<0.000000e+00> : vector<80x64xf32>
    %87 = tpu.matmul %84, %86, %cst_51 {dimension_numbers = #tpu.dot_dimension_numbers<[1], [0], [0], [1], [0, 0, 1, 1], [], []>} : vector<80x32xf32>, vector<32x64xf32>, vector<80x64xf32> -> vector<80x64xf32>
    %88 = arith.addf %82, %87 : vector<80x64xf32>
    %89 = vector.extract_strided_slice %33 {offsets = [0, 2, 1, 0], sizes = [2, 5, 8, 32], strides = [1, 1, 1, 1]} : vector<2x8x16x32xf32> to vector<2x5x8x32xf32>
    %90 = vector.shape_cast %89 : vector<2x5x8x32xf32> to vector<80x32xf32>
    %c9 = arith.constant 9 : index
    %c0_52 = arith.constant 0 : index
    %c0_53 = arith.constant 0 : index
    %91 = vector.load %arg3[%c9, %c0_52, %c0_53] : memref<16x32x64xf32, #tpu.memory_space<vmem>>, vector<1x32x64xf32>
    %92 = vector.shape_cast %91 : vector<1x32x64xf32> to vector<32x64xf32>
    %cst_54 = arith.constant dense<0.000000e+00> : vector<80x64xf32>
    %93 = tpu.matmul %90, %92, %cst_54 {dimension_numbers = #tpu.dot_dimension_numbers<[1], [0], [0], [1], [0, 0, 1, 1], [], []>} : vector<80x32xf32>, vector<32x64xf32>, vector<80x64xf32> -> vector<80x64xf32>
    %94 = arith.addf %88, %93 : vector<80x64xf32>
    %95 = vector.extract_strided_slice %33 {offsets = [0, 2, 2, 0], sizes = [2, 5, 8, 32], strides = [1, 1, 1, 1]} : vector<2x8x16x32xf32> to vector<2x5x8x32xf32>
    %96 = vector.shape_cast %95 : vector<2x5x8x32xf32> to vector<80x32xf32>
    %c10 = arith.constant 10 : index
    %c0_55 = arith.constant 0 : index
    %c0_56 = arith.constant 0 : index
    %97 = vector.load %arg3[%c10, %c0_55, %c0_56] : memref<16x32x64xf32, #tpu.memory_space<vmem>>, vector<1x32x64xf32>
    %98 = vector.shape_cast %97 : vector<1x32x64xf32> to vector<32x64xf32>
    %cst_57 = arith.constant dense<0.000000e+00> : vector<80x64xf32>
    %99 = tpu.matmul %96, %98, %cst_57 {dimension_numbers = #tpu.dot_dimension_numbers<[1], [0], [0], [1], [0, 0, 1, 1], [], []>} : vector<80x32xf32>, vector<32x64xf32>, vector<80x64xf32> -> vector<80x64xf32>
    %100 = arith.addf %94, %99 : vector<80x64xf32>
    %101 = vector.extract_strided_slice %33 {offsets = [0, 2, 3, 0], sizes = [2, 5, 8, 32], strides = [1, 1, 1, 1]} : vector<2x8x16x32xf32> to vector<2x5x8x32xf32>
    %102 = vector.shape_cast %101 : vector<2x5x8x32xf32> to vector<80x32xf32>
    %c11 = arith.constant 11 : index
    %c0_58 = arith.constant 0 : index
    %c0_59 = arith.constant 0 : index
    %103 = vector.load %arg3[%c11, %c0_58, %c0_59] : memref<16x32x64xf32, #tpu.memory_space<vmem>>, vector<1x32x64xf32>
    %104 = vector.shape_cast %103 : vector<1x32x64xf32> to vector<32x64xf32>
    %cst_60 = arith.constant dense<0.000000e+00> : vector<80x64xf32>
    %105 = tpu.matmul %102, %104, %cst_60 {dimension_numbers = #tpu.dot_dimension_numbers<[1], [0], [0], [1], [0, 0, 1, 1], [], []>} : vector<80x32xf32>, vector<32x64xf32>, vector<80x64xf32> -> vector<80x64xf32>
    %106 = arith.addf %100, %105 : vector<80x64xf32>
    %107 = vector.extract_strided_slice %33 {offsets = [0, 3, 0, 0], sizes = [2, 5, 8, 32], strides = [1, 1, 1, 1]} : vector<2x8x16x32xf32> to vector<2x5x8x32xf32>
    %108 = vector.shape_cast %107 : vector<2x5x8x32xf32> to vector<80x32xf32>
    %c12 = arith.constant 12 : index
    %c0_61 = arith.constant 0 : index
    %c0_62 = arith.constant 0 : index
    %109 = vector.load %arg3[%c12, %c0_61, %c0_62] : memref<16x32x64xf32, #tpu.memory_space<vmem>>, vector<1x32x64xf32>
    %110 = vector.shape_cast %109 : vector<1x32x64xf32> to vector<32x64xf32>
    %cst_63 = arith.constant dense<0.000000e+00> : vector<80x64xf32>
    %111 = tpu.matmul %108, %110, %cst_63 {dimension_numbers = #tpu.dot_dimension_numbers<[1], [0], [0], [1], [0, 0, 1, 1], [], []>} : vector<80x32xf32>, vector<32x64xf32>, vector<80x64xf32> -> vector<80x64xf32>
    %112 = arith.addf %106, %111 : vector<80x64xf32>
    %113 = vector.extract_strided_slice %33 {offsets = [0, 3, 1, 0], sizes = [2, 5, 8, 32], strides = [1, 1, 1, 1]} : vector<2x8x16x32xf32> to vector<2x5x8x32xf32>
    %114 = vector.shape_cast %113 : vector<2x5x8x32xf32> to vector<80x32xf32>
    %c13 = arith.constant 13 : index
    %c0_64 = arith.constant 0 : index
    %c0_65 = arith.constant 0 : index
    %115 = vector.load %arg3[%c13, %c0_64, %c0_65] : memref<16x32x64xf32, #tpu.memory_space<vmem>>, vector<1x32x64xf32>
    %116 = vector.shape_cast %115 : vector<1x32x64xf32> to vector<32x64xf32>
    %cst_66 = arith.constant dense<0.000000e+00> : vector<80x64xf32>
    %117 = tpu.matmul %114, %116, %cst_66 {dimension_numbers = #tpu.dot_dimension_numbers<[1], [0], [0], [1], [0, 0, 1, 1], [], []>} : vector<80x32xf32>, vector<32x64xf32>, vector<80x64xf32> -> vector<80x64xf32>
    %118 = arith.addf %112, %117 : vector<80x64xf32>
    %119 = vector.extract_strided_slice %33 {offsets = [0, 3, 2, 0], sizes = [2, 5, 8, 32], strides = [1, 1, 1, 1]} : vector<2x8x16x32xf32> to vector<2x5x8x32xf32>
    %120 = vector.shape_cast %119 : vector<2x5x8x32xf32> to vector<80x32xf32>
    %c14 = arith.constant 14 : index
    %c0_67 = arith.constant 0 : index
    %c0_68 = arith.constant 0 : index
    %121 = vector.load %arg3[%c14, %c0_67, %c0_68] : memref<16x32x64xf32, #tpu.memory_space<vmem>>, vector<1x32x64xf32>
    %122 = vector.shape_cast %121 : vector<1x32x64xf32> to vector<32x64xf32>
    %cst_69 = arith.constant dense<0.000000e+00> : vector<80x64xf32>
    %123 = tpu.matmul %120, %122, %cst_69 {dimension_numbers = #tpu.dot_dimension_numbers<[1], [0], [0], [1], [0, 0, 1, 1], [], []>} : vector<80x32xf32>, vector<32x64xf32>, vector<80x64xf32> -> vector<80x64xf32>
    %124 = arith.addf %118, %123 : vector<80x64xf32>
    %125 = vector.extract_strided_slice %33 {offsets = [0, 3, 3, 0], sizes = [2, 5, 8, 32], strides = [1, 1, 1, 1]} : vector<2x8x16x32xf32> to vector<2x5x8x32xf32>
    %126 = vector.shape_cast %125 : vector<2x5x8x32xf32> to vector<80x32xf32>
    %c15 = arith.constant 15 : index
    %c0_70 = arith.constant 0 : index
    %c0_71 = arith.constant 0 : index
    %127 = vector.load %arg3[%c15, %c0_70, %c0_71] : memref<16x32x64xf32, #tpu.memory_space<vmem>>, vector<1x32x64xf32>
    %128 = vector.shape_cast %127 : vector<1x32x64xf32> to vector<32x64xf32>
    %cst_72 = arith.constant dense<0.000000e+00> : vector<80x64xf32>
    %129 = tpu.matmul %126, %128, %cst_72 {dimension_numbers = #tpu.dot_dimension_numbers<[1], [0], [0], [1], [0, 0, 1, 1], [], []>} : vector<80x32xf32>, vector<32x64xf32>, vector<80x64xf32> -> vector<80x64xf32>
    %130 = arith.addf %124, %129 : vector<80x64xf32>
    %c0_73 = arith.constant 0 : index
    %c0_74 = arith.constant 0 : index
    %131 = vector.load %arg4[%c0_73, %c0_74] : memref<1x64xf32, #tpu.memory_space<vmem>>, vector<1x64xf32>
    %132 = vector.broadcast %131 : vector<1x64xf32> to vector<80x64xf32>
    %133 = arith.addf %130, %132 : vector<80x64xf32>
    %cst_75 = arith.constant 0.000000e+00 : f32
    %134 = vector.broadcast %cst_75 : f32 to vector<80x64xf32>
    %135 = arith.maximumf %133, %134 : vector<80x64xf32>
    %136 = vector.shape_cast %135 : vector<80x64xf32> to vector<2x5x8x64xf32>
    %cst_76 = arith.constant 0.000000e+00 : f32
    %137 = vector.broadcast %cst_76 : f32 to vector<2x64xf32>
    %138 = vector.extract_strided_slice %136 {offsets = [0, 0, 0, 0], sizes = [2, 1, 1, 64], strides = [1, 1, 1, 1]} : vector<2x5x8x64xf32> to vector<2x1x1x64xf32>
    %139 = vector.shape_cast %138 : vector<2x1x1x64xf32> to vector<2x64xf32>
    %c0_77 = arith.constant 0 : index
    %c0_78 = arith.constant 0 : index
    %c0_79 = arith.constant 0 : index
    %140 = vector.load %arg5[%c0_77, %c0_78, %c0_79] : memref<9x64x64xf32, #tpu.memory_space<vmem>>, vector<1x64x64xf32>
    %141 = vector.shape_cast %140 : vector<1x64x64xf32> to vector<64x64xf32>
    %cst_80 = arith.constant dense<0.000000e+00> : vector<2x64xf32>
    %142 = tpu.matmul %139, %141, %cst_80 {dimension_numbers = #tpu.dot_dimension_numbers<[1], [0], [0], [1], [0, 0, 1, 1], [], []>} : vector<2x64xf32>, vector<64x64xf32>, vector<2x64xf32> -> vector<2x64xf32>
    %143 = arith.addf %137, %142 : vector<2x64xf32>
    %144 = vector.extract_strided_slice %136 {offsets = [0, 0, 2, 0], sizes = [2, 1, 1, 64], strides = [1, 1, 1, 1]} : vector<2x5x8x64xf32> to vector<2x1x1x64xf32>
    %145 = vector.shape_cast %144 : vector<2x1x1x64xf32> to vector<2x64xf32>
    %c1_81 = arith.constant 1 : index
    %c0_82 = arith.constant 0 : index
    %c0_83 = arith.constant 0 : index
    %146 = vector.load %arg5[%c1_81, %c0_82, %c0_83] : memref<9x64x64xf32, #tpu.memory_space<vmem>>, vector<1x64x64xf32>
    %147 = vector.shape_cast %146 : vector<1x64x64xf32> to vector<64x64xf32>
    %cst_84 = arith.constant dense<0.000000e+00> : vector<2x64xf32>
    %148 = tpu.matmul %145, %147, %cst_84 {dimension_numbers = #tpu.dot_dimension_numbers<[1], [0], [0], [1], [0, 0, 1, 1], [], []>} : vector<2x64xf32>, vector<64x64xf32>, vector<2x64xf32> -> vector<2x64xf32>
    %149 = arith.addf %143, %148 : vector<2x64xf32>
    %150 = vector.extract_strided_slice %136 {offsets = [0, 0, 4, 0], sizes = [2, 1, 1, 64], strides = [1, 1, 1, 1]} : vector<2x5x8x64xf32> to vector<2x1x1x64xf32>
    %151 = vector.shape_cast %150 : vector<2x1x1x64xf32> to vector<2x64xf32>
    %c2_85 = arith.constant 2 : index
    %c0_86 = arith.constant 0 : index
    %c0_87 = arith.constant 0 : index
    %152 = vector.load %arg5[%c2_85, %c0_86, %c0_87] : memref<9x64x64xf32, #tpu.memory_space<vmem>>, vector<1x64x64xf32>
    %153 = vector.shape_cast %152 : vector<1x64x64xf32> to vector<64x64xf32>
    %cst_88 = arith.constant dense<0.000000e+00> : vector<2x64xf32>
    %154 = tpu.matmul %151, %153, %cst_88 {dimension_numbers = #tpu.dot_dimension_numbers<[1], [0], [0], [1], [0, 0, 1, 1], [], []>} : vector<2x64xf32>, vector<64x64xf32>, vector<2x64xf32> -> vector<2x64xf32>
    %155 = arith.addf %149, %154 : vector<2x64xf32>
    %156 = vector.extract_strided_slice %136 {offsets = [0, 2, 0, 0], sizes = [2, 1, 1, 64], strides = [1, 1, 1, 1]} : vector<2x5x8x64xf32> to vector<2x1x1x64xf32>
    %157 = vector.shape_cast %156 : vector<2x1x1x64xf32> to vector<2x64xf32>
    %c3_89 = arith.constant 3 : index
    %c0_90 = arith.constant 0 : index
    %c0_91 = arith.constant 0 : index
    %158 = vector.load %arg5[%c3_89, %c0_90, %c0_91] : memref<9x64x64xf32, #tpu.memory_space<vmem>>, vector<1x64x64xf32>
    %159 = vector.shape_cast %158 : vector<1x64x64xf32> to vector<64x64xf32>
    %cst_92 = arith.constant dense<0.000000e+00> : vector<2x64xf32>
    %160 = tpu.matmul %157, %159, %cst_92 {dimension_numbers = #tpu.dot_dimension_numbers<[1], [0], [0], [1], [0, 0, 1, 1], [], []>} : vector<2x64xf32>, vector<64x64xf32>, vector<2x64xf32> -> vector<2x64xf32>
    %161 = arith.addf %155, %160 : vector<2x64xf32>
    %162 = vector.extract_strided_slice %136 {offsets = [0, 2, 2, 0], sizes = [2, 1, 1, 64], strides = [1, 1, 1, 1]} : vector<2x5x8x64xf32> to vector<2x1x1x64xf32>
    %163 = vector.shape_cast %162 : vector<2x1x1x64xf32> to vector<2x64xf32>
    %c4_93 = arith.constant 4 : index
    %c0_94 = arith.constant 0 : index
    %c0_95 = arith.constant 0 : index
    %164 = vector.load %arg5[%c4_93, %c0_94, %c0_95] : memref<9x64x64xf32, #tpu.memory_space<vmem>>, vector<1x64x64xf32>
    %165 = vector.shape_cast %164 : vector<1x64x64xf32> to vector<64x64xf32>
    %cst_96 = arith.constant dense<0.000000e+00> : vector<2x64xf32>
    %166 = tpu.matmul %163, %165, %cst_96 {dimension_numbers = #tpu.dot_dimension_numbers<[1], [0], [0], [1], [0, 0, 1, 1], [], []>} : vector<2x64xf32>, vector<64x64xf32>, vector<2x64xf32> -> vector<2x64xf32>
    %167 = arith.addf %161, %166 : vector<2x64xf32>
    %168 = vector.extract_strided_slice %136 {offsets = [0, 2, 4, 0], sizes = [2, 1, 1, 64], strides = [1, 1, 1, 1]} : vector<2x5x8x64xf32> to vector<2x1x1x64xf32>
    %169 = vector.shape_cast %168 : vector<2x1x1x64xf32> to vector<2x64xf32>
    %c5_97 = arith.constant 5 : index
    %c0_98 = arith.constant 0 : index
    %c0_99 = arith.constant 0 : index
    %170 = vector.load %arg5[%c5_97, %c0_98, %c0_99] : memref<9x64x64xf32, #tpu.memory_space<vmem>>, vector<1x64x64xf32>
    %171 = vector.shape_cast %170 : vector<1x64x64xf32> to vector<64x64xf32>
    %cst_100 = arith.constant dense<0.000000e+00> : vector<2x64xf32>
    %172 = tpu.matmul %169, %171, %cst_100 {dimension_numbers = #tpu.dot_dimension_numbers<[1], [0], [0], [1], [0, 0, 1, 1], [], []>} : vector<2x64xf32>, vector<64x64xf32>, vector<2x64xf32> -> vector<2x64xf32>
    %173 = arith.addf %167, %172 : vector<2x64xf32>
    %174 = vector.extract_strided_slice %136 {offsets = [0, 4, 0, 0], sizes = [2, 1, 1, 64], strides = [1, 1, 1, 1]} : vector<2x5x8x64xf32> to vector<2x1x1x64xf32>
    %175 = vector.shape_cast %174 : vector<2x1x1x64xf32> to vector<2x64xf32>
    %c6_101 = arith.constant 6 : index
    %c0_102 = arith.constant 0 : index
    %c0_103 = arith.constant 0 : index
    %176 = vector.load %arg5[%c6_101, %c0_102, %c0_103] : memref<9x64x64xf32, #tpu.memory_space<vmem>>, vector<1x64x64xf32>
    %177 = vector.shape_cast %176 : vector<1x64x64xf32> to vector<64x64xf32>
    %cst_104 = arith.constant dense<0.000000e+00> : vector<2x64xf32>
    %178 = tpu.matmul %175, %177, %cst_104 {dimension_numbers = #tpu.dot_dimension_numbers<[1], [0], [0], [1], [0, 0, 1, 1], [], []>} : vector<2x64xf32>, vector<64x64xf32>, vector<2x64xf32> -> vector<2x64xf32>
    %179 = arith.addf %173, %178 : vector<2x64xf32>
    %180 = vector.extract_strided_slice %136 {offsets = [0, 4, 2, 0], sizes = [2, 1, 1, 64], strides = [1, 1, 1, 1]} : vector<2x5x8x64xf32> to vector<2x1x1x64xf32>
    %181 = vector.shape_cast %180 : vector<2x1x1x64xf32> to vector<2x64xf32>
    %c7_105 = arith.constant 7 : index
    %c0_106 = arith.constant 0 : index
    %c0_107 = arith.constant 0 : index
    %182 = vector.load %arg5[%c7_105, %c0_106, %c0_107] : memref<9x64x64xf32, #tpu.memory_space<vmem>>, vector<1x64x64xf32>
    %183 = vector.shape_cast %182 : vector<1x64x64xf32> to vector<64x64xf32>
    %cst_108 = arith.constant dense<0.000000e+00> : vector<2x64xf32>
    %184 = tpu.matmul %181, %183, %cst_108 {dimension_numbers = #tpu.dot_dimension_numbers<[1], [0], [0], [1], [0, 0, 1, 1], [], []>} : vector<2x64xf32>, vector<64x64xf32>, vector<2x64xf32> -> vector<2x64xf32>
    %185 = arith.addf %179, %184 : vector<2x64xf32>
    %186 = vector.extract_strided_slice %136 {offsets = [0, 4, 4, 0], sizes = [2, 1, 1, 64], strides = [1, 1, 1, 1]} : vector<2x5x8x64xf32> to vector<2x1x1x64xf32>
    %187 = vector.shape_cast %186 : vector<2x1x1x64xf32> to vector<2x64xf32>
    %c8_109 = arith.constant 8 : index
    %c0_110 = arith.constant 0 : index
    %c0_111 = arith.constant 0 : index
    %188 = vector.load %arg5[%c8_109, %c0_110, %c0_111] : memref<9x64x64xf32, #tpu.memory_space<vmem>>, vector<1x64x64xf32>
    %189 = vector.shape_cast %188 : vector<1x64x64xf32> to vector<64x64xf32>
    %cst_112 = arith.constant dense<0.000000e+00> : vector<2x64xf32>
    %190 = tpu.matmul %187, %189, %cst_112 {dimension_numbers = #tpu.dot_dimension_numbers<[1], [0], [0], [1], [0, 0, 1, 1], [], []>} : vector<2x64xf32>, vector<64x64xf32>, vector<2x64xf32> -> vector<2x64xf32>
    %191 = arith.addf %185, %190 : vector<2x64xf32>
    %c0_113 = arith.constant 0 : index
    %c0_114 = arith.constant 0 : index
    %192 = vector.load %arg6[%c0_113, %c0_114] : memref<1x64xf32, #tpu.memory_space<vmem>>, vector<1x64xf32>
    %193 = vector.broadcast %192 : vector<1x64xf32> to vector<2x64xf32>
    %194 = arith.addf %191, %193 : vector<2x64xf32>
    %cst_115 = arith.constant 0.000000e+00 : f32
    %195 = vector.broadcast %cst_115 : f32 to vector<2x64xf32>
    %196 = arith.maximumf %194, %195 : vector<2x64xf32>
    %c0_116 = arith.constant 0 : index
    %c0_117 = arith.constant 0 : index
    %197 = vector.load %arg7[%c0_116, %c0_117] : memref<64x768xf32, #tpu.memory_space<vmem>>, vector<64x768xf32>
    %cst_118 = arith.constant dense<0.000000e+00> : vector<2x768xf32>
    %198 = tpu.matmul %196, %197, %cst_118 {dimension_numbers = #tpu.dot_dimension_numbers<[1], [0], [0], [1], [0, 0, 1, 1], [], []>} : vector<2x64xf32>, vector<64x768xf32>, vector<2x768xf32> -> vector<2x768xf32>
    %c0_119 = arith.constant 0 : index
    %c0_120 = arith.constant 0 : index
    %199 = vector.load %arg8[%c0_119, %c0_120] : memref<1x768xf32, #tpu.memory_space<vmem>>, vector<1x768xf32>
    %200 = vector.broadcast %199 : vector<1x768xf32> to vector<2x768xf32>
    %201 = arith.addf %198, %200 : vector<2x768xf32>
    %cst_121 = arith.constant 0.000000e+00 : f32
    %202 = vector.broadcast %cst_121 : f32 to vector<2x768xf32>
    %203 = arith.maximumf %201, %202 : vector<2x768xf32>
    %c0_122 = arith.constant 0 : index
    %c0_123 = arith.constant 0 : index
    %204 = vector.load %arg9[%c0_122, %c0_123] : memref<768x8xf32, #tpu.memory_space<vmem>>, vector<768x8xf32>
    %cst_124 = arith.constant dense<0.000000e+00> : vector<2x8xf32>
    %205 = tpu.matmul %203, %204, %cst_124 {dimension_numbers = #tpu.dot_dimension_numbers<[1], [0], [0], [1], [0, 0, 1, 1], [], []>} : vector<2x768xf32>, vector<768x8xf32>, vector<2x8xf32> -> vector<2x8xf32>
    %c0_125 = arith.constant 0 : index
    %c0_126 = arith.constant 0 : index
    %206 = vector.load %arg10[%c0_125, %c0_126] : memref<1x8xf32, #tpu.memory_space<vmem>>, vector<1x8xf32>
    %207 = vector.broadcast %206 : vector<1x8xf32> to vector<2x8xf32>
    %208 = arith.addf %205, %207 : vector<2x8xf32>
    %c0_127 = arith.constant 0 : index
    %c0_128 = arith.constant 0 : index
    %209 = vector.load %arg11[%c0_127, %c0_128] : memref<2x8xf32, #tpu.memory_space<vmem>>, vector<2x8xf32>
    tpu.vector_store %arg11[%c0_127, %c0_128], %208 {strides = array<i32>} : memref<2x8xf32, #tpu.memory_space<vmem>>, vector<2x8xf32>,
    return
  }
}

</mosaic_0001>

<llo_original>
// kernel: forward.1
$region0: #{forward.1}
  #allocation0 [shape = 'u32[]', space=smem, size = 0x4, offset = 0x4, fixed_abs, tag = 'smem constant byte address 0x4 - core index']
  #allocation1 [shape = 'u32[72,128]{1,0:T(1,128)}', space=vmem, size = 0x9000, scoped, tag = 'internal scratch']
  %s0 = inlined_call_operand.vmem [shape: f32[2,9,9,64], index: 0, kind: input, shape index: {}]
  %s1 = inlined_call_operand.vmem [shape: f32[4,64,32], index: 1, kind: input, shape index: {}]
  %s2 = inlined_call_operand.vmem [shape: f32[1,32], index: 2, kind: input, shape index: {}]
  %s3 = inlined_call_operand.vmem [shape: f32[16,32,64], index: 3, kind: input, shape index: {}]
  %s4 = inlined_call_operand.vmem [shape: f32[1,64], index: 4, kind: input, shape index: {}]
  %s5 = inlined_call_operand.vmem [shape: f32[9,64,64], index: 5, kind: input, shape index: {}]
  %s6 = inlined_call_operand.vmem [shape: f32[1,64], index: 6, kind: input, shape index: {}]
  %s7 = inlined_call_operand.vmem [shape: f32[64,768], index: 7, kind: input, shape index: {}]
  %s8 = inlined_call_operand.vmem [shape: f32[1,768], index: 8, kind: input, shape index: {}]
  %s9 = inlined_call_operand.vmem [shape: f32[768,8], index: 9, kind: input, shape index: {}]
  %s10 = inlined_call_operand.vmem [shape: f32[1,8], index: 10, kind: input, shape index: {}]
  %s11 = inlined_call_operand.vmem [shape: f32[2,8], index: 11, kind: output, shape index: {}]
  %s12 = sld [smem:[#allocation0]]
  $region54: #{forward.1} parent=0
    _
  %s14 = ssub.s32 1, %s12
  %s15 = scalar_select 0, %s14, %s12
  // Predicated region
  $region2: #{forward.1} parent=0 // pred_check
    _
  $region3: #{forward.1} parent=0 // pred_check_branch
    %17 = sbr.rel (0) target = $region5
  $region4: #{forward.1} parent=0 // pred_region
    _
  $region5: #{forward.1} parent=0 // pred_fallthru
    _
  // Predicated region
  $region6: #{forward.1} parent=0 // pred_check
    _
  $region7: #{forward.1} parent=0 // pred_check_branch
    %19 = sbr.rel (0) target = $region9
  $region8: #{forward.1} parent=0 // pred_region
    _
  $region9: #{forward.1} parent=0 // pred_fallthru
    _
  // Predicated region
  $region10: #{forward.1} parent=0 // pred_check
    _
  $region11: #{forward.1} parent=0 // pred_check_branch
    %21 = sbr.rel (0) target = $region13
  $region12: #{forward.1} parent=0 // pred_region
    _
  $region13: #{forward.1} parent=0 // pred_fallthru
    _
  // Predicated region
  $region14: #{forward.1} parent=0 // pred_check
    _
  $region15: #{forward.1} parent=0 // pred_check_branch
    %23 = sbr.rel (0) target = $region17
  $region16: #{forward.1} parent=0 // pred_region
    _
  $region17: #{forward.1} parent=0 // pred_fallthru
    _
  // Predicated region
  $region18: #{forward.1} parent=0 // pred_check
    _
  $region19: #{forward.1} parent=0 // pred_check_branch
    %25 = sbr.rel (0) target = $region21
  $region20: #{forward.1} parent=0 // pred_region
    _
  $region21: #{forward.1} parent=0 // pred_fallthru
    _
  // Predicated region
  $region22: #{forward.1} parent=0 // pred_check
    _
  $region23: #{forward.1} parent=0 // pred_check_branch
    %27 = sbr.rel (0) target = $region25
  $region24: #{forward.1} parent=0 // pred_region
    _
  $region25: #{forward.1} parent=0 // pred_fallthru
    _
  // Predicated region
  $region26: #{forward.1} parent=0 // pred_check
    _
  $region27: #{forward.1} parent=0 // pred_check_branch
    %29 = sbr.rel (0) target = $region29
  $region28: #{forward.1} parent=0 // pred_region
    _
  $region29: #{forward.1} parent=0 // pred_fallthru
    _
  // Predicated region
  $region30: #{forward.1} parent=0 // pred_check
    _
  $region31: #{forward.1} parent=0 // pred_check_branch
    %31 = sbr.rel (0) target = $region33
  $region32: #{forward.1} parent=0 // pred_region
    _
  $region33: #{forward.1} parent=0 // pred_fallthru
    _
  // Predicated region
  $region34: #{forward.1} parent=0 // pred_check
    _
  $region35: #{forward.1} parent=0 // pred_check_branch
    %33 = sbr.rel (0) target = $region37
  $region36: #{forward.1} parent=0 // pred_region
    _
  $region37: #{forward.1} parent=0 // pred_fallthru
    _
  // Predicated region
  $region38: #{forward.1} parent=0 // pred_check
    _
  $region39: #{forward.1} parent=0 // pred_check_branch
    %35 = sbr.rel (0) target = $region41
  $region40: #{forward.1} parent=0 // pred_region
    _
  $region41: #{forward.1} parent=0 // pred_fallthru
    _
  // Predicated region
  $region42: #{forward.1} parent=0 // pred_check
    _
  $region43: #{forward.1} parent=0 // pred_check_branch
    %37 = sbr.rel (0) target = $region45
  $region44: #{forward.1} parent=0 // pred_region
    _
  $region45: #{forward.1} parent=0 // pred_fallthru
    _
  %v38 = vld [vmem:[%s0] sm:$0xff]
  %v39 = vld [vmem:[%s0 + $0x8] sm:$0x1]
  %v40 = vld [vmem:[%s0 + $0x10] sm:$0xff]
  %v41 = vld [vmem:[%s0 + $0x18] sm:$0x1]
  %v42 = vld [vmem:[%s0 + $0x20] sm:$0xff]
  %v43 = vld [vmem:[%s0 + $0x28] sm:$0x1]
  %v44 = vld [vmem:[%s0 + $0x30] sm:$0xff]
  %v45 = vld [vmem:[%s0 + $0x38] sm:$0x1]
  %v46 = vld [vmem:[%s0 + $0x40] sm:$0xff]
  %v47 = vld [vmem:[%s0 + $0x48] sm:$0x1]
  %v48 = vld [vmem:[%s0 + $0x50] sm:$0xff]
  %v49 = vld [vmem:[%s0 + $0x58] sm:$0x1]
  %v50 = vld [vmem:[%s0 + $0x60] sm:$0xff]
  %v51 = vld [vmem:[%s0 + $0x68] sm:$0x1]
  %v52 = vld [vmem:[%s0 + $0x70] sm:$0xff]
  %v53 = vld [vmem:[%s0 + $0x78] sm:$0x1]
  %v54 = vld [vmem:[%s0 + $0x80] sm:$0xff]
  %v55 = vld [vmem:[%s0 + $0x88] sm:$0x1]
  %v56 = vld [vmem:[%s0 + $0x90] sm:$0xff]
  %v57 = vld [vmem:[%s0 + $0x98] sm:$0x1]
  %v58 = vld [vmem:[%s0 + $0xa0] sm:$0xff]
  %v59 = vld [vmem:[%s0 + $0xa8] sm:$0x1]
  %v60 = vld [vmem:[%s0 + $0xb0] sm:$0xff]
  %v61 = vld [vmem:[%s0 + $0xb8] sm:$0x1]
  %v62 = vld [vmem:[%s0 + $0xc0] sm:$0xff]
  %v63 = vld [vmem:[%s0 + $0xc8] sm:$0x1]
  %v64 = vld [vmem:[%s0 + $0xd0] sm:$0xff]
  %v65 = vld [vmem:[%s0 + $0xd8] sm:$0x1]
  %v66 = vld [vmem:[%s0 + $0xe0] sm:$0xff]
  %v67 = vld [vmem:[%s0 + $0xe8] sm:$0x1]
  %v68 = vld [vmem:[%s0 + $0xf0] sm:$0xff]
  %v69 = vld [vmem:[%s0 + $0xf8] sm:$0x1]
  %v70 = vld [vmem:[%s0 + $0x100] sm:$0xff]
  %v71 = vld [vmem:[%s0 + $0x108] sm:$0x1]
  %v72 = vld [vmem:[%s0 + $0x110] sm:$0xff]
  %v73 = vld [vmem:[%s0 + $0x118] sm:$0x1]
  %v74 = vld [vmem:[%s1] sm:$0xff]
  %v75 = vld [vmem:[%s1 + $0x8] sm:$0xff]
  %v76 = vld [vmem:[%s1 + $0x10] sm:$0xff]
  %v77 = vld [vmem:[%s1 + $0x18] sm:$0xff]
  %v78 = vld [vmem:[%s1 + $0x20] sm:$0xff]
  %v79 = vld [vmem:[%s1 + $0x28] sm:$0xff]
  %v80 = vld [vmem:[%s1 + $0x30] sm:$0xff]
  %v81 = vld [vmem:[%s1 + $0x38] sm:$0xff]
  %vm114 = vcmask 1046528
  %v115 = vrot.slane %v38, 1
  %v116 = vrot.slane %v39, 1
  %v117 = vsel %vm114, %v115, %v116
  %v118 = vrot.slane %v40, 1
  %v119 = vrot.slane %v41, 1
  %v120 = vsel %vm114, %v118, %v119
  %v121 = vrot.slane %v42, 1
  %v122 = vrot.slane %v43, 1
  %v123 = vsel %vm114, %v121, %v122
  %v124 = vrot.slane %v44, 1
  %v125 = vrot.slane %v45, 1
  %v126 = vsel %vm114, %v124, %v125
  %v127 = vrot.slane %v46, 1
  %v128 = vrot.slane %v47, 1
  %v129 = vsel %vm114, %v127, %v128
  %v130 = vrot.slane %v48, 1
  %v131 = vrot.slane %v49, 1
  %v132 = vsel %vm114, %v130, %v131
  %v133 = vrot.slane %v50, 1
  %v134 = vrot.slane %v51, 1
  %v135 = vsel %vm114, %v133, %v134
  %v136 = vrot.slane %v52, 1
  %v137 = vrot.slane %v53, 1
  %v138 = vsel %vm114, %v136, %v137
  %v139 = vrot.slane %v56, 1
  %v140 = vrot.slane %v57, 1
  %v141 = vsel %vm114, %v139, %v140
  %v142 = vrot.slane %v58, 1
  %v143 = vrot.slane %v59, 1
  %v144 = vsel %vm114, %v142, %v143
  %v145 = vrot.slane %v60, 1
  %v146 = vrot.slane %v61, 1
  %v147 = vsel %vm114, %v145, %v146
  %v148 = vrot.slane %v62, 1
  %v149 = vrot.slane %v63, 1
  %v150 = vsel %vm114, %v148, %v149
  %v151 = vrot.slane %v64, 1
  %v152 = vrot.slane %v65, 1
  %v153 = vsel %vm114, %v151, %v152
  %v154 = vrot.slane %v66, 1
  %v155 = vrot.slane %v67, 1
  %v156 = vsel %vm114, %v154, %v155
  %v157 = vrot.slane %v68, 1
  %v158 = vrot.slane %v69, 1
  %v159 = vsel %vm114, %v157, %v158
  %v160 = vrot.slane %v70, 1
  %v161 = vrot.slane %v71, 1
  %v162 = vsel %vm114, %v160, %v161
  %s163 = scalar_lea.vmem %s1, 64
  %v164 = vld [vmem:[%s163] sm:$0xff]
  %v165 = vld [vmem:[%s163 + $0x8] sm:$0xff]
  %v166 = vld [vmem:[%s163 + $0x10] sm:$0xff]
  %v167 = vld [vmem:[%s163 + $0x18] sm:$0xff]
  %v168 = vld [vmem:[%s163 + $0x20] sm:$0xff]
  %v169 = vld [vmem:[%s163 + $0x28] sm:$0xff]
  %v170 = vld [vmem:[%s163 + $0x30] sm:$0xff]
  %v171 = vld [vmem:[%s163 + $0x38] sm:$0xff]
  %vm172 = vcmask 523264
  %v173 = vsel %vm172, %v117, 0
  %v175 = vsel %vm172, %v120, 0
  %v177 = vsel %vm172, %v123, 0
  %v179 = vsel %vm172, %v126, 0
  %v181 = vsel %vm172, %v129, 0
  %v183 = vsel %vm172, %v132, 0
  %v185 = vsel %vm172, %v135, 0
  %v187 = vsel %vm172, %v138, 0
  %v189 = vsel %vm172, %v141, 0
  %v191 = vsel %vm172, %v144, 0
  %v193 = vsel %vm172, %v147, 0
  %v195 = vsel %vm172, %v150, 0
  %v197 = vsel %vm172, %v153, 0
  %v199 = vsel %vm172, %v156, 0
  %v201 = vsel %vm172, %v159, 0
  %v203 = vsel %vm172, %v162, 0
  %205 = vmatpush.msra.mxu0 0.0
  %206 = vmatpush.msra.mxu0 0.0
  %207 = vmatpush.msra.mxu0 0.0
  %208 = vmatpush.msra.mxu0 0.0
  %209 = vmatpush.msra.mxu0 0.0
  %210 = vmatpush.msra.mxu0 0.0
  %211 = vmatpush.msra.mxu0 0.0
  %212 = vmatpush.msra.mxu0 0.0
  %213 = vmatpush.msra.mxu0 %v171
  %214 = vmatpush.msra.mxu0 %v170
  %215 = vmatpush.msra.mxu0 %v169
  %216 = vmatpush.msra.mxu0 %v168
  %217 = vmatpush.msra.mxu0 %v167
  %218 = vmatpush.msra.mxu0 %v166
  %219 = vmatpush.msra.mxu0 %v165
  %220 = vmatpush.msra.mxu0 %v164
  %221 = vmatmul.f32.gmra.mxu0 %v173
  %v222 = vpop.f32.mrf.mxu0
  %v223 = vadd.f32 0.0, %v222
  %224 = vmatmul.f32.gmra.mxu0 %v175
  %v225 = vpop.f32.mrf.mxu0
  %v226 = vadd.f32 0.0, %v225
  %227 = vmatmul.f32.gmra.mxu0 %v177
  %v228 = vpop.f32.mrf.mxu0
  %v229 = vadd.f32 0.0, %v228
  %230 = vmatmul.f32.gmra.mxu0 %v179
  %v231 = vpop.f32.mrf.mxu0
  %v232 = vadd.f32 0.0, %v231
  %233 = vmatmul.f32.gmra.mxu0 %v181
  %v234 = vpop.f32.mrf.mxu0
  %v235 = vadd.f32 0.0, %v234
  %236 = vmatmul.f32.gmra.mxu0 %v183
  %v237 = vpop.f32.mrf.mxu0
  %v238 = vadd.f32 0.0, %v237
  %239 = vmatmul.f32.gmra.mxu0 %v185
  %v240 = vpop.f32.mrf.mxu0
  %v241 = vadd.f32 0.0, %v240
  %242 = vmatmul.f32.gmra.mxu0 %v187
  %v243 = vpop.f32.mrf.mxu0
  %v244 = vadd.f32 0.0, %v243
  %245 = vmatmul.f32.gmra.mxu0 %v189
  %v246 = vpop.f32.mrf.mxu0
  %v247 = vadd.f32 0.0, %v246
  %248 = vmatmul.f32.gmra.mxu0 %v191
  %v249 = vpop.f32.mrf.mxu0
  %v250 = vadd.f32 0.0, %v249
  %251 = vmatmul.f32.gmra.mxu0 %v193
  %v252 = vpop.f32.mrf.mxu0
  %v253 = vadd.f32 0.0, %v252
  %254 = vmatmul.f32.gmra.mxu0 %v195
  %v255 = vpop.f32.mrf.mxu0
  %v256 = vadd.f32 0.0, %v255
  %257 = vmatmul.f32.gmra.mxu0 %v197
  %v258 = vpop.f32.mrf.mxu0
  %v259 = vadd.f32 0.0, %v258
  %260 = vmatmul.f32.gmra.mxu0 %v199
  %v261 = vpop.f32.mrf.mxu0
  %v262 = vadd.f32 0.0, %v261
  %263 = vmatmul.f32.gmra.mxu0 %v201
  %v264 = vpop.f32.mrf.mxu0
  %v265 = vadd.f32 0.0, %v264
  %266 = vmatmul.f32.gmra.mxu0 %v203
  %v267 = vpop.f32.mrf.mxu0
  %v268 = vadd.f32 0.0, %v267
  %269 = vdwg.mxu0
  %v270 = vsel %vm172, %v38, 0
  %v272 = vsel %vm172, %v40, 0
  %v274 = vsel %vm172, %v42, 0
  %v276 = vsel %vm172, %v44, 0
  %v278 = vsel %vm172, %v46, 0
  %v280 = vsel %vm172, %v48, 0
  %v282 = vsel %vm172, %v50, 0
  %v284 = vsel %vm172, %v52, 0
  %v286 = vsel %vm172, %v56, 0
  %v288 = vsel %vm172, %v58, 0
  %v290 = vsel %vm172, %v60, 0
  %v292 = vsel %vm172, %v62, 0
  %v294 = vsel %vm172, %v64, 0
  %v296 = vsel %vm172, %v66, 0
  %v298 = vsel %vm172, %v68, 0
  %v300 = vsel %vm172, %v70, 0
  %302 = vmatpush.msra.mxu0 0.0
  %303 = vmatpush.msra.mxu0 0.0
  %304 = vmatpush.msra.mxu0 0.0
  %305 = vmatpush.msra.mxu0 0.0
  %306 = vmatpush.msra.mxu0 0.0
  %307 = vmatpush.msra.mxu0 0.0
  %308 = vmatpush.msra.mxu0 0.0
  %309 = vmatpush.msra.mxu0 0.0
  %310 = vmatpush.msra.mxu0 %v81
  %311 = vmatpush.msra.mxu0 %v80
  %312 = vmatpush.msra.mxu0 %v79
  %313 = vmatpush.msra.mxu0 %v78
  %314 = vmatpush.msra.mxu0 %v77
  %315 = vmatpush.msra.mxu0 %v76
  %316 = vmatpush.msra.mxu0 %v75
  %317 = vmatpush.msra.mxu0 %v74
  %318 = vmatmul.f32.gmra.mxu0 %v270
  %v319 = vpop.f32.mrf.mxu0
  %v320 = vadd.f32 %v223, %v319
  %321 = vmatmul.f32.gmra.mxu0 %v272
  %v322 = vpop.f32.mrf.mxu0
  %v323 = vadd.f32 %v226, %v322
  %324 = vmatmul.f32.gmra.mxu0 %v274
  %v325 = vpop.f32.mrf.mxu0
  %v326 = vadd.f32 %v229, %v325
  %327 = vmatmul.f32.gmra.mxu0 %v276
  %v328 = vpop.f32.mrf.mxu0
  %v329 = vadd.f32 %v232, %v328
  %330 = vmatmul.f32.gmra.mxu0 %v278
  %v331 = vpop.f32.mrf.mxu0
  %v332 = vadd.f32 %v235, %v331
  %333 = vmatmul.f32.gmra.mxu0 %v280
  %v334 = vpop.f32.mrf.mxu0
  %v335 = vadd.f32 %v238, %v334
  %336 = vmatmul.f32.gmra.mxu0 %v282
  %v337 = vpop.f32.mrf.mxu0
  %v338 = vadd.f32 %v241, %v337
  %339 = vmatmul.f32.gmra.mxu0 %v284
  %v340 = vpop.f32.mrf.mxu0
  %v341 = vadd.f32 %v244, %v340
  %342 = vmatmul.f32.gmra.mxu0 %v286
  %v343 = vpop.f32.mrf.mxu0
  %v344 = vadd.f32 %v247, %v343
  %345 = vmatmul.f32.gmra.mxu0 %v288
  %v346 = vpop.f32.mrf.mxu0
  %v347 = vadd.f32 %v250, %v346
  %348 = vmatmul.f32.gmra.mxu0 %v290
  %v349 = vpop.f32.mrf.mxu0
  %v350 = vadd.f32 %v253, %v349
  %351 = vmatmul.f32.gmra.mxu0 %v292
  %v352 = vpop.f32.mrf.mxu0
  %v353 = vadd.f32 %v256, %v352
  %354 = vmatmul.f32.gmra.mxu0 %v294
  %v355 = vpop.f32.mrf.mxu0
  %v356 = vadd.f32 %v259, %v355
  %357 = vmatmul.f32.gmra.mxu0 %v296
  %v358 = vpop.f32.mrf.mxu0
  %v359 = vadd.f32 %v262, %v358
  %360 = vmatmul.f32.gmra.mxu0 %v298
  %v361 = vpop.f32.mrf.mxu0
  %v362 = vadd.f32 %v265, %v361
  %363 = vmatmul.f32.gmra.mxu0 %v300
  %v364 = vpop.f32.mrf.mxu0
  %v365 = vadd.f32 %v268, %v364
  %366 = vdwg.mxu0
  %s367 = scalar_lea.vmem %s1, 128
  %v368 = vld [vmem:[%s367] sm:$0xff]
  %v369 = vld [vmem:[%s367 + $0x8] sm:$0xff]
  %v370 = vld [vmem:[%s367 + $0x10] sm:$0xff]
  %v371 = vld [vmem:[%s367 + $0x18] sm:$0xff]
  %v372 = vld [vmem:[%s367 + $0x20] sm:$0xff]
  %v373 = vld [vmem:[%s367 + $0x28] sm:$0xff]
  %v374 = vld [vmem:[%s367 + $0x30] sm:$0xff]
  %v375 = vld [vmem:[%s367 + $0x38] sm:$0xff]
  %v377 = vsel %vm172, %v54, 0
  %v380 = vsel %vm172, %v72, 0
  %382 = vmatpush.msra.mxu0 0.0
  %383 = vmatpush.msra.mxu0 0.0
  %384 = vmatpush.msra.mxu0 0.0
  %385 = vmatpush.msra.mxu0 0.0
  %386 = vmatpush.msra.mxu0 0.0
  %387 = vmatpush.msra.mxu0 0.0
  %388 = vmatpush.msra.mxu0 0.0
  %389 = vmatpush.msra.mxu0 0.0
  %390 = vmatpush.msra.mxu0 %v375
  %391 = vmatpush.msra.mxu0 %v374
  %392 = vmatpush.msra.mxu0 %v373
  %393 = vmatpush.msra.mxu0 %v372
  %394 = vmatpush.msra.mxu0 %v371
  %395 = vmatpush.msra.mxu0 %v370
  %396 = vmatpush.msra.mxu0 %v369
  %397 = vmatpush.msra.mxu0 %v368
  %398 = vmatmul.f32.gmra.mxu0 %v272
  %v399 = vpop.f32.mrf.mxu0
  %v400 = vadd.f32 0.0, %v399
  %401 = vmatmul.f32.gmra.mxu0 %v274
  %v402 = vpop.f32.mrf.mxu0
  %v403 = vadd.f32 0.0, %v402
  %404 = vmatmul.f32.gmra.mxu0 %v276
  %v405 = vpop.f32.mrf.mxu0
  %v406 = vadd.f32 0.0, %v405
  %407 = vmatmul.f32.gmra.mxu0 %v278
  %v408 = vpop.f32.mrf.mxu0
  %v409 = vadd.f32 0.0, %v408
  %410 = vmatmul.f32.gmra.mxu0 %v280
  %v411 = vpop.f32.mrf.mxu0
  %v412 = vadd.f32 0.0, %v411
  %413 = vmatmul.f32.gmra.mxu0 %v282
  %v414 = vpop.f32.mrf.mxu0
  %v415 = vadd.f32 0.0, %v414
  %416 = vmatmul.f32.gmra.mxu0 %v284
  %v417 = vpop.f32.mrf.mxu0
  %v418 = vadd.f32 0.0, %v417
  %419 = vmatmul.f32.gmra.mxu0 %v377
  %v420 = vpop.f32.mrf.mxu0
  %v421 = vadd.f32 0.0, %v420
  %422 = vmatmul.f32.gmra.mxu0 %v288
  %v423 = vpop.f32.mrf.mxu0
  %v424 = vadd.f32 0.0, %v423
  %425 = vmatmul.f32.gmra.mxu0 %v290
  %v426 = vpop.f32.mrf.mxu0
  %v427 = vadd.f32 0.0, %v426
  %428 = vmatmul.f32.gmra.mxu0 %v292
  %v429 = vpop.f32.mrf.mxu0
  %v430 = vadd.f32 0.0, %v429
  %431 = vmatmul.f32.gmra.mxu0 %v294
  %v432 = vpop.f32.mrf.mxu0
  %v433 = vadd.f32 0.0, %v432
  %434 = vmatmul.f32.gmra.mxu0 %v296
  %v435 = vpop.f32.mrf.mxu0
  %v436 = vadd.f32 0.0, %v435
  %437 = vmatmul.f32.gmra.mxu0 %v298
  %v438 = vpop.f32.mrf.mxu0
  %v439 = vadd.f32 0.0, %v438
  %440 = vmatmul.f32.gmra.mxu0 %v300
  %v441 = vpop.f32.mrf.mxu0
  %v442 = vadd.f32 0.0, %v441
  %443 = vmatmul.f32.gmra.mxu0 %v380
  %v444 = vpop.f32.mrf.mxu0
  %v445 = vadd.f32 0.0, %v444
  %446 = vdwg.mxu0
  %v447 = vadd.f32 %v320, %v400
  %v448 = vadd.f32 %v323, %v403
  %v449 = vadd.f32 %v326, %v406
  %v450 = vadd.f32 %v329, %v409
  %v451 = vadd.f32 %v332, %v412
  %v452 = vadd.f32 %v335, %v415
  %v453 = vadd.f32 %v338, %v418
  %v454 = vadd.f32 %v341, %v421
  %v455 = vadd.f32 %v344, %v424
  %v456 = vadd.f32 %v347, %v427
  %v457 = vadd.f32 %v350, %v430
  %v458 = vadd.f32 %v353, %v433
  %v459 = vadd.f32 %v356, %v436
  %v460 = vadd.f32 %v359, %v439
  %v461 = vadd.f32 %v362, %v442
  %v462 = vadd.f32 %v365, %v445
  %v465 = vrot.slane %v54, 1
  %v466 = vrot.slane %v55, 1
  %v467 = vsel %vm114, %v465, %v466
  %v468 = vrot.slane %v72, 1
  %v469 = vrot.slane %v73, 1
  %v470 = vsel %vm114, %v468, %v469
  %s471 = scalar_lea.vmem %s1, 192
  %v472 = vld [vmem:[%s471] sm:$0xff]
  %v473 = vld [vmem:[%s471 + $0x8] sm:$0xff]
  %v474 = vld [vmem:[%s471 + $0x10] sm:$0xff]
  %v475 = vld [vmem:[%s471 + $0x18] sm:$0xff]
  %v476 = vld [vmem:[%s471 + $0x20] sm:$0xff]
  %v477 = vld [vmem:[%s471 + $0x28] sm:$0xff]
  %v478 = vld [vmem:[%s471 + $0x30] sm:$0xff]
  %v479 = vld [vmem:[%s471 + $0x38] sm:$0xff]
  %v480 = vsel %vm172, %v467, 0
  %v482 = vsel %vm172, %v470, 0
  %484 = vmatpush.msra.mxu0 0.0
  %485 = vmatpush.msra.mxu0 0.0
  %486 = vmatpush.msra.mxu0 0.0
  %487 = vmatpush.msra.mxu0 0.0
  %488 = vmatpush.msra.mxu0 0.0
  %489 = vmatpush.msra.mxu0 0.0
  %490 = vmatpush.msra.mxu0 0.0
  %491 = vmatpush.msra.mxu0 0.0
  %492 = vmatpush.msra.mxu0 %v479
  %493 = vmatpush.msra.mxu0 %v478
  %494 = vmatpush.msra.mxu0 %v477
  %495 = vmatpush.msra.mxu0 %v476
  %496 = vmatpush.msra.mxu0 %v475
  %497 = vmatpush.msra.mxu0 %v474
  %498 = vmatpush.msra.mxu0 %v473
  %499 = vmatpush.msra.mxu0 %v472
  %500 = vmatmul.f32.gmra.mxu0 %v175
  %v501 = vpop.f32.mrf.mxu0
  %v502 = vadd.f32 0.0, %v501
  %503 = vmatmul.f32.gmra.mxu0 %v177
  %v504 = vpop.f32.mrf.mxu0
  %v505 = vadd.f32 0.0, %v504
  %506 = vmatmul.f32.gmra.mxu0 %v179
  %v507 = vpop.f32.mrf.mxu0
  %v508 = vadd.f32 0.0, %v507
  %509 = vmatmul.f32.gmra.mxu0 %v181
  %v510 = vpop.f32.mrf.mxu0
  %v511 = vadd.f32 0.0, %v510
  %512 = vmatmul.f32.gmra.mxu0 %v183
  %v513 = vpop.f32.mrf.mxu0
  %v514 = vadd.f32 0.0, %v513
  %515 = vmatmul.f32.gmra.mxu0 %v185
  %v516 = vpop.f32.mrf.mxu0
  %v517 = vadd.f32 0.0, %v516
  %518 = vmatmul.f32.gmra.mxu0 %v187
  %v519 = vpop.f32.mrf.mxu0
  %v520 = vadd.f32 0.0, %v519
  %521 = vmatmul.f32.gmra.mxu0 %v480
  %v522 = vpop.f32.mrf.mxu0
  %v523 = vadd.f32 0.0, %v522
  %524 = vmatmul.f32.gmra.mxu0 %v191
  %v525 = vpop.f32.mrf.mxu0
  %v526 = vadd.f32 0.0, %v525
  %527 = vmatmul.f32.gmra.mxu0 %v193
  %v528 = vpop.f32.mrf.mxu0
  %v529 = vadd.f32 0.0, %v528
  %530 = vmatmul.f32.gmra.mxu0 %v195
  %v531 = vpop.f32.mrf.mxu0
  %v532 = vadd.f32 0.0, %v531
  %533 = vmatmul.f32.gmra.mxu0 %v197
  %v534 = vpop.f32.mrf.mxu0
  %v535 = vadd.f32 0.0, %v534
  %536 = vmatmul.f32.gmra.mxu0 %v199
  %v537 = vpop.f32.mrf.mxu0
  %v538 = vadd.f32 0.0, %v537
  %539 = vmatmul.f32.gmra.mxu0 %v201
  %v540 = vpop.f32.mrf.mxu0
  %v541 = vadd.f32 0.0, %v540
  %542 = vmatmul.f32.gmra.mxu0 %v203
  %v543 = vpop.f32.mrf.mxu0
  %v544 = vadd.f32 0.0, %v543
  %545 = vmatmul.f32.gmra.mxu0 %v482
  %v546 = vpop.f32.mrf.mxu0
  %v547 = vadd.f32 0.0, %v546
  %548 = vdwg.mxu0
  %v549 = vadd.f32 %v447, %v502
  %v550 = vadd.f32 %v448, %v505
  %v551 = vadd.f32 %v449, %v508
  %v552 = vadd.f32 %v450, %v511
  %v553 = vadd.f32 %v451, %v514
  %v554 = vadd.f32 %v452, %v517
  %v555 = vadd.f32 %v453, %v520
  %v556 = vadd.f32 %v454, %v523
  %v557 = vadd.f32 %v455, %v526
  %v558 = vadd.f32 %v456, %v529
  %v559 = vadd.f32 %v457, %v532
  %v560 = vadd.f32 %v458, %v535
  %v561 = vadd.f32 %v459, %v538
  %v562 = vadd.f32 %v460, %v541
  %v563 = vadd.f32 %v461, %v544
  %v564 = vadd.f32 %v462, %v547
  %v565 = vld [vmem:[%s2] sm:$0x1]
  %v567 = vperm.slane %v565, 0
  %v569 = vadd.f32 %v549, %v567
  %v570 = vadd.f32 %v550, %v567
  %v571 = vadd.f32 %v551, %v567
  %v572 = vadd.f32 %v552, %v567
  %v573 = vadd.f32 %v553, %v567
  %v574 = vadd.f32 %v554, %v567
  %v575 = vadd.f32 %v555, %v567
  %v576 = vadd.f32 %v556, %v567
  %v577 = vadd.f32 %v557, %v567
  %v578 = vadd.f32 %v558, %v567
  %v579 = vadd.f32 %v559, %v567
  %v580 = vadd.f32 %v560, %v567
  %v581 = vadd.f32 %v561, %v567
  %v582 = vadd.f32 %v562, %v567
  %v583 = vadd.f32 %v563, %v567
  %v584 = vadd.f32 %v564, %v567
  %v585 = vmax.f32 %v569, 0.0
  %v586 = vmax.f32 %v570, 0.0
  %v587 = vmax.f32 %v571, 0.0
  %v588 = vmax.f32 %v572, 0.0
  %v589 = vmax.f32 %v573, 0.0
  %v590 = vmax.f32 %v574, 0.0
  %v591 = vmax.f32 %v575, 0.0
  %v592 = vmax.f32 %v576, 0.0
  %v593 = vmax.f32 %v577, 0.0
  %v594 = vmax.f32 %v578, 0.0
  %v595 = vmax.f32 %v579, 0.0
  %v596 = vmax.f32 %v580, 0.0
  %v597 = vmax.f32 %v581, 0.0
  %v598 = vmax.f32 %v582, 0.0
  %v599 = vmax.f32 %v583, 0.0
  %v600 = vmax.f32 %v584, 0.0
  %v601 = vld [vmem:[%s3] sm:$0xff]
  %v602 = vld [vmem:[%s3 + $0x8] sm:$0xff]
  %v603 = vld [vmem:[%s3 + $0x10] sm:$0xff]
  %v604 = vld [vmem:[%s3 + $0x18] sm:$0xff]
  %v616 = vrot.slane %v585, 1
  %v617 = vrot.slane 0.0, 1
  %v618 = vsel %vm114, %v616, %v617
  %v619 = vrot.slane %v586, 1
  %v620 = vsel %vm114, %v619, %v617
  %v621 = vrot.slane %v587, 1
  %v622 = vsel %vm114, %v621, %v617
  %v623 = vrot.slane %v588, 1
  %v624 = vsel %vm114, %v623, %v617
  %v625 = vrot.slane %v589, 1
  %v626 = vsel %vm114, %v625, %v617
  %v627 = vrot.slane %v593, 1
  %v628 = vsel %vm114, %v627, %v617
  %v629 = vrot.slane %v594, 1
  %v630 = vsel %vm114, %v629, %v617
  %v631 = vrot.slane %v595, 1
  %v632 = vsel %vm114, %v631, %v617
  %v633 = vrot.slane %v596, 1
  %v634 = vsel %vm114, %v633, %v617
  %v635 = vrot.slane %v597, 1
  %v636 = vsel %vm114, %v635, %v617
  %s637 = scalar_lea.vmem %s3, 32
  %v638 = vld [vmem:[%s637] sm:$0xff]
  %v639 = vld [vmem:[%s637 + $0x8] sm:$0xff]
  %v640 = vld [vmem:[%s637 + $0x10] sm:$0xff]
  %v641 = vld [vmem:[%s637 + $0x18] sm:$0xff]
  %vm642 = vcmask 261120
  %v643 = vsel %vm642, %v618, 0
  %v645 = vsel %vm642, %v620, 0
  %v647 = vsel %vm642, %v622, 0
  %v649 = vsel %vm642, %v624, 0
  %v651 = vsel %vm642, %v626, 0
  %v653 = vsel %vm642, %v628, 0
  %v655 = vsel %vm642, %v630, 0
  %v657 = vsel %vm642, %v632, 0
  %v659 = vsel %vm642, %v634, 0
  %v661 = vsel %vm642, %v636, 0
  %663 = vmatpush.msra.mxu0 0.0
  %664 = vmatpush.msra.mxu0 0.0
  %665 = vmatpush.msra.mxu0 0.0
  %666 = vmatpush.msra.mxu0 0.0
  %667 = vmatpush.msra.mxu0 0.0
  %668 = vmatpush.msra.mxu0 0.0
  %669 = vmatpush.msra.mxu0 0.0
  %670 = vmatpush.msra.mxu0 0.0
  %671 = vmatpush.msra.mxu0 0.0
  %672 = vmatpush.msra.mxu0 0.0
  %673 = vmatpush.msra.mxu0 0.0
  %674 = vmatpush.msra.mxu0 0.0
  %675 = vmatpush.msra.mxu0 %v641
  %676 = vmatpush.msra.mxu0 %v640
  %677 = vmatpush.msra.mxu0 %v639
  %678 = vmatpush.msra.mxu0 %v638
  %679 = vmatmul.f32.gmra.mxu0 %v643
  %v680 = vpop.f32.mrf.mxu0
  %v681 = vadd.f32 0.0, %v680
  %682 = vmatmul.f32.gmra.mxu0 %v645
  %v683 = vpop.f32.mrf.mxu0
  %684 = vmatmul.f32.gmra.mxu0 %v647
  %v685 = vpop.f32.mrf.mxu0
  %v686 = vadd.f32 0.0, %v685
  %687 = vmatmul.f32.gmra.mxu0 %v649
  %v688 = vpop.f32.mrf.mxu0
  %689 = vmatmul.f32.gmra.mxu0 %v651
  %v690 = vpop.f32.mrf.mxu0
  %v691 = vadd.f32 0.0, %v690
  %692 = vmatmul.f32.gmra.mxu0 %v653
  %v693 = vpop.f32.mrf.mxu0
  %v694 = vadd.f32 0.0, %v693
  %695 = vmatmul.f32.gmra.mxu0 %v655
  %v696 = vpop.f32.mrf.mxu0
  %697 = vmatmul.f32.gmra.mxu0 %v657
  %v698 = vpop.f32.mrf.mxu0
  %v699 = vadd.f32 0.0, %v698
  %700 = vmatmul.f32.gmra.mxu0 %v659
  %v701 = vpop.f32.mrf.mxu0
  %702 = vmatmul.f32.gmra.mxu0 %v661
  %v703 = vpop.f32.mrf.mxu0
  %v704 = vadd.f32 0.0, %v703
  %705 = vdwg.mxu0
  %v706 = vsel %vm642, %v585, 0
  %v708 = vsel %vm642, %v586, 0
  %v710 = vsel %vm642, %v587, 0
  %v712 = vsel %vm642, %v588, 0
  %v714 = vsel %vm642, %v589, 0
  %v716 = vsel %vm642, %v593, 0
  %v718 = vsel %vm642, %v594, 0
  %v720 = vsel %vm642, %v595, 0
  %v722 = vsel %vm642, %v596, 0
  %v724 = vsel %vm642, %v597, 0
  %726 = vmatpush.msra.mxu0 0.0
  %727 = vmatpush.msra.mxu0 0.0
  %728 = vmatpush.msra.mxu0 0.0
  %729 = vmatpush.msra.mxu0 0.0
  %730 = vmatpush.msra.mxu0 0.0
  %731 = vmatpush.msra.mxu0 0.0
  %732 = vmatpush.msra.mxu0 0.0
  %733 = vmatpush.msra.mxu0 0.0
  %734 = vmatpush.msra.mxu0 0.0
  %735 = vmatpush.msra.mxu0 0.0
  %736 = vmatpush.msra.mxu0 0.0
  %737 = vmatpush.msra.mxu0 0.0
  %738 = vmatpush.msra.mxu0 %v604
  %739 = vmatpush.msra.mxu0 %v603
  %740 = vmatpush.msra.mxu0 %v602
  %741 = vmatpush.msra.mxu0 %v601
  %742 = vmatmul.f32.gmra.mxu0 %v706
  %v743 = vpop.f32.mrf.mxu0
  %v744 = vadd.f32 %v681, %v743
  %745 = vmatmul.f32.gmra.mxu0 %v708
  %v746 = vpop.f32.mrf.mxu0
  %747 = vmatmul.f32.gmra.mxu0 %v710
  %v748 = vpop.f32.mrf.mxu0
  %v749 = vadd.f32 %v686, %v748
  %750 = vmatmul.f32.gmra.mxu0 %v712
  %v751 = vpop.f32.mrf.mxu0
  %752 = vmatmul.f32.gmra.mxu0 %v714
  %v753 = vpop.f32.mrf.mxu0
  %v754 = vadd.f32 %v691, %v753
  %755 = vmatmul.f32.gmra.mxu0 %v716
  %v756 = vpop.f32.mrf.mxu0
  %v757 = vadd.f32 %v694, %v756
  %758 = vmatmul.f32.gmra.mxu0 %v718
  %v759 = vpop.f32.mrf.mxu0
  %760 = vmatmul.f32.gmra.mxu0 %v720
  %v761 = vpop.f32.mrf.mxu0
  %v762 = vadd.f32 %v699, %v761
  %763 = vmatmul.f32.gmra.mxu0 %v722
  %v764 = vpop.f32.mrf.mxu0
  %765 = vmatmul.f32.gmra.mxu0 %v724
  %v766 = vpop.f32.mrf.mxu0
  %v767 = vadd.f32 %v704, %v766
  %768 = vdwg.mxu0
  %vm769 = vcmask 1045504
  %v770 = vrot.slane %v585, 2
  %v771 = vrot.slane 0.0, 2
  %v772 = vsel %vm769, %v770, %v771
  %v773 = vrot.slane %v586, 2
  %v774 = vsel %vm769, %v773, %v771
  %v775 = vrot.slane %v587, 2
  %v776 = vsel %vm769, %v775, %v771
  %v777 = vrot.slane %v588, 2
  %v778 = vsel %vm769, %v777, %v771
  %v779 = vrot.slane %v589, 2
  %v780 = vsel %vm769, %v779, %v771
  %v781 = vrot.slane %v593, 2
  %v782 = vsel %vm769, %v781, %v771
  %v783 = vrot.slane %v594, 2
  %v784 = vsel %vm769, %v783, %v771
  %v785 = vrot.slane %v595, 2
  %v786 = vsel %vm769, %v785, %v771
  %v787 = vrot.slane %v596, 2
  %v788 = vsel %vm769, %v787, %v771
  %v789 = vrot.slane %v597, 2
  %v790 = vsel %vm769, %v789, %v771
  %s791 = scalar_lea.vmem %s3, 64
  %v792 = vld [vmem:[%s791] sm:$0xff]
  %v793 = vld [vmem:[%s791 + $0x8] sm:$0xff]
  %v794 = vld [vmem:[%s791 + $0x10] sm:$0xff]
  %v795 = vld [vmem:[%s791 + $0x18] sm:$0xff]
  %v796 = vsel %vm642, %v772, 0
  %v798 = vsel %vm642, %v774, 0
  %v800 = vsel %vm642, %v776, 0
  %v802 = vsel %vm642, %v778, 0
  %v804 = vsel %vm642, %v780, 0
  %v806 = vsel %vm642, %v782, 0
  %v808 = vsel %vm642, %v784, 0
  %v810 = vsel %vm642, %v786, 0
  %v812 = vsel %vm642, %v788, 0
  %v814 = vsel %vm642, %v790, 0
  %816 = vmatpush.msra.mxu0 0.0
  %817 = vmatpush.msra.mxu0 0.0
  %818 = vmatpush.msra.mxu0 0.0
  %819 = vmatpush.msra.mxu0 0.0
  %820 = vmatpush.msra.mxu0 0.0
  %821 = vmatpush.msra.mxu0 0.0
  %822 = vmatpush.msra.mxu0 0.0
  %823 = vmatpush.msra.mxu0 0.0
  %824 = vmatpush.msra.mxu0 0.0
  %825 = vmatpush.msra.mxu0 0.0
  %826 = vmatpush.msra.mxu0 0.0
  %827 = vmatpush.msra.mxu0 0.0
  %828 = vmatpush.msra.mxu0 %v795
  %829 = vmatpush.msra.mxu0 %v794
  %830 = vmatpush.msra.mxu0 %v793
  %831 = vmatpush.msra.mxu0 %v792
  %832 = vmatmul.f32.gmra.mxu0 %v796
  %v833 = vpop.f32.mrf.mxu0
  %v834 = vadd.f32 0.0, %v833
  %835 = vmatmul.f32.gmra.mxu0 %v798
  %v836 = vpop.f32.mrf.mxu0
  %837 = vmatmul.f32.gmra.mxu0 %v800
  %v838 = vpop.f32.mrf.mxu0
  %v839 = vadd.f32 0.0, %v838
  %840 = vmatmul.f32.gmra.mxu0 %v802
  %v841 = vpop.f32.mrf.mxu0
  %842 = vmatmul.f32.gmra.mxu0 %v804
  %v843 = vpop.f32.mrf.mxu0
  %v844 = vadd.f32 0.0, %v843
  %845 = vmatmul.f32.gmra.mxu0 %v806
  %v846 = vpop.f32.mrf.mxu0
  %v847 = vadd.f32 0.0, %v846
  %848 = vmatmul.f32.gmra.mxu0 %v808
  %v849 = vpop.f32.mrf.mxu0
  %850 = vmatmul.f32.gmra.mxu0 %v810
  %v851 = vpop.f32.mrf.mxu0
  %v852 = vadd.f32 0.0, %v851
  %853 = vmatmul.f32.gmra.mxu0 %v812
  %v854 = vpop.f32.mrf.mxu0
  %855 = vmatmul.f32.gmra.mxu0 %v814
  %v856 = vpop.f32.mrf.mxu0
  %v857 = vadd.f32 0.0, %v856
  %858 = vdwg.mxu0
  %v859 = vadd.f32 %v744, %v834
  %v860 = vadd.f32 %v749, %v839
  %v861 = vadd.f32 %v754, %v844
  %v862 = vadd.f32 %v757, %v847
  %v863 = vadd.f32 %v762, %v852
  %v864 = vadd.f32 %v767, %v857
  %vm865 = vcmask 1044480
  %v866 = vrot.slane %v585, 3
  %v867 = vrot.slane 0.0, 3
  %v868 = vsel %vm865, %v866, %v867
  %v869 = vrot.slane %v586, 3
  %v870 = vsel %vm865, %v869, %v867
  %v871 = vrot.slane %v587, 3
  %v872 = vsel %vm865, %v871, %v867
  %v873 = vrot.slane %v588, 3
  %v874 = vsel %vm865, %v873, %v867
  %v875 = vrot.slane %v589, 3
  %v876 = vsel %vm865, %v875, %v867
  %v877 = vrot.slane %v593, 3
  %v878 = vsel %vm865, %v877, %v867
  %v879 = vrot.slane %v594, 3
  %v880 = vsel %vm865, %v879, %v867
  %v881 = vrot.slane %v595, 3
  %v882 = vsel %vm865, %v881, %v867
  %v883 = vrot.slane %v596, 3
  %v884 = vsel %vm865, %v883, %v867
  %v885 = vrot.slane %v597, 3
  %v886 = vsel %vm865, %v885, %v867
  %s887 = scalar_lea.vmem %s3, 96
  %v888 = vld [vmem:[%s887] sm:$0xff]
  %v889 = vld [vmem:[%s887 + $0x8] sm:$0xff]
  %v890 = vld [vmem:[%s887 + $0x10] sm:$0xff]
  %v891 = vld [vmem:[%s887 + $0x18] sm:$0xff]
  %v892 = vsel %vm642, %v868, 0
  %v894 = vsel %vm642, %v870, 0
  %v896 = vsel %vm642, %v872, 0
  %v898 = vsel %vm642, %v874, 0
  %v900 = vsel %vm642, %v876, 0
  %v902 = vsel %vm642, %v878, 0
  %v904 = vsel %vm642, %v880, 0
  %v906 = vsel %vm642, %v882, 0
  %v908 = vsel %vm642, %v884, 0
  %v910 = vsel %vm642, %v886, 0
  %912 = vmatpush.msra.mxu0 0.0
  %913 = vmatpush.msra.mxu0 0.0
  %914 = vmatpush.msra.mxu0 0.0
  %915 = vmatpush.msra.mxu0 0.0
  %916 = vmatpush.msra.mxu0 0.0
  %917 = vmatpush.msra.mxu0 0.0
  %918 = vmatpush.msra.mxu0 0.0
  %919 = vmatpush.msra.mxu0 0.0
  %920 = vmatpush.msra.mxu0 0.0
  %921 = vmatpush.msra.mxu0 0.0
  %922 = vmatpush.msra.mxu0 0.0
  %923 = vmatpush.msra.mxu0 0.0
  %924 = vmatpush.msra.mxu0 %v891
  %925 = vmatpush.msra.mxu0 %v890
  %926 = vmatpush.msra.mxu0 %v889
  %927 = vmatpush.msra.mxu0 %v888
  %928 = vmatmul.f32.gmra.mxu0 %v892
  %v929 = vpop.f32.mrf.mxu0
  %v930 = vadd.f32 0.0, %v929
  %931 = vmatmul.f32.gmra.mxu0 %v894
  %v932 = vpop.f32.mrf.mxu0
  %933 = vmatmul.f32.gmra.mxu0 %v896
  %v934 = vpop.f32.mrf.mxu0
  %v935 = vadd.f32 0.0, %v934
  %936 = vmatmul.f32.gmra.mxu0 %v898
  %v937 = vpop.f32.mrf.mxu0
  %938 = vmatmul.f32.gmra.mxu0 %v900
  %v939 = vpop.f32.mrf.mxu0
  %v940 = vadd.f32 0.0, %v939
  %941 = vmatmul.f32.gmra.mxu0 %v902
  %v942 = vpop.f32.mrf.mxu0
  %v943 = vadd.f32 0.0, %v942
  %944 = vmatmul.f32.gmra.mxu0 %v904
  %v945 = vpop.f32.mrf.mxu0
  %946 = vmatmul.f32.gmra.mxu0 %v906
  %v947 = vpop.f32.mrf.mxu0
  %v948 = vadd.f32 0.0, %v947
  %949 = vmatmul.f32.gmra.mxu0 %v908
  %v950 = vpop.f32.mrf.mxu0
  %951 = vmatmul.f32.gmra.mxu0 %v910
  %v952 = vpop.f32.mrf.mxu0
  %v953 = vadd.f32 0.0, %v952
  %954 = vdwg.mxu0
  %v955 = vadd.f32 %v859, %v930
  %v956 = vadd.f32 %v860, %v935
  %v957 = vadd.f32 %v861, %v940
  %v958 = vadd.f32 %v862, %v943
  %v959 = vadd.f32 %v863, %v948
  %v960 = vadd.f32 %v864, %v953
  %s961 = scalar_lea.vmem %s3, 128
  %v962 = vld [vmem:[%s961] sm:$0xff]
  %v963 = vld [vmem:[%s961 + $0x8] sm:$0xff]
  %v964 = vld [vmem:[%s961 + $0x10] sm:$0xff]
  %v965 = vld [vmem:[%s961 + $0x18] sm:$0xff]
  %v967 = vsel %vm642, %v590, 0
  %v970 = vsel %vm642, %v598, 0
  %972 = vmatpush.msra.mxu0 0.0
  %973 = vmatpush.msra.mxu0 0.0
  %974 = vmatpush.msra.mxu0 0.0
  %975 = vmatpush.msra.mxu0 0.0
  %976 = vmatpush.msra.mxu0 0.0
  %977 = vmatpush.msra.mxu0 0.0
  %978 = vmatpush.msra.mxu0 0.0
  %979 = vmatpush.msra.mxu0 0.0
  %980 = vmatpush.msra.mxu0 0.0
  %981 = vmatpush.msra.mxu0 0.0
  %982 = vmatpush.msra.mxu0 0.0
  %983 = vmatpush.msra.mxu0 0.0
  %984 = vmatpush.msra.mxu0 %v965
  %985 = vmatpush.msra.mxu0 %v964
  %986 = vmatpush.msra.mxu0 %v963
  %987 = vmatpush.msra.mxu0 %v962
  %988 = vmatmul.f32.gmra.mxu0 %v708
  %v989 = vpop.f32.mrf.mxu0
  %v990 = vadd.f32 0.0, %v989
  %991 = vmatmul.f32.gmra.mxu0 %v710
  %v992 = vpop.f32.mrf.mxu0
  %993 = vmatmul.f32.gmra.mxu0 %v712
  %v994 = vpop.f32.mrf.mxu0
  %v995 = vadd.f32 0.0, %v994
  %996 = vmatmul.f32.gmra.mxu0 %v714
  %v997 = vpop.f32.mrf.mxu0
  %998 = vmatmul.f32.gmra.mxu0 %v967
  %v999 = vpop.f32.mrf.mxu0
  %v1000 = vadd.f32 0.0, %v999
  %1001 = vmatmul.f32.gmra.mxu0 %v718
  %v1002 = vpop.f32.mrf.mxu0
  %v1003 = vadd.f32 0.0, %v1002
  %1004 = vmatmul.f32.gmra.mxu0 %v720
  %v1005 = vpop.f32.mrf.mxu0
  %1006 = vmatmul.f32.gmra.mxu0 %v722
  %v1007 = vpop.f32.mrf.mxu0
  %v1008 = vadd.f32 0.0, %v1007
  %1009 = vmatmul.f32.gmra.mxu0 %v724
  %v1010 = vpop.f32.mrf.mxu0
  %1011 = vmatmul.f32.gmra.mxu0 %v970
  %v1012 = vpop.f32.mrf.mxu0
  %v1013 = vadd.f32 0.0, %v1012
  %1014 = vdwg.mxu0
  %v1015 = vadd.f32 %v955, %v990
  %v1016 = vadd.f32 %v956, %v995
  %v1017 = vadd.f32 %v957, %v1000
  %v1018 = vadd.f32 %v958, %v1003
  %v1019 = vadd.f32 %v959, %v1008
  %v1020 = vadd.f32 %v960, %v1013
  %v1021 = vrot.slane %v590, 1
  %v1022 = vsel %vm114, %v1021, %v617
  %v1023 = vrot.slane %v598, 1
  %v1024 = vsel %vm114, %v1023, %v617
  %s1025 = scalar_lea.vmem %s3, 160
  %v1026 = vld [vmem:[%s1025] sm:$0xff]
  %v1027 = vld [vmem:[%s1025 + $0x8] sm:$0xff]
  %v1028 = vld [vmem:[%s1025 + $0x10] sm:$0xff]
  %v1029 = vld [vmem:[%s1025 + $0x18] sm:$0xff]
  %v1030 = vsel %vm642, %v1022, 0
  %v1032 = vsel %vm642, %v1024, 0
  %1034 = vmatpush.msra.mxu0 0.0
  %1035 = vmatpush.msra.mxu0 0.0
  %1036 = vmatpush.msra.mxu0 0.0
  %1037 = vmatpush.msra.mxu0 0.0
  %1038 = vmatpush.msra.mxu0 0.0
  %1039 = vmatpush.msra.mxu0 0.0
  %1040 = vmatpush.msra.mxu0 0.0
  %1041 = vmatpush.msra.mxu0 0.0
  %1042 = vmatpush.msra.mxu0 0.0
  %1043 = vmatpush.msra.mxu0 0.0
  %1044 = vmatpush.msra.mxu0 0.0
  %1045 = vmatpush.msra.mxu0 0.0
  %1046 = vmatpush.msra.mxu0 %v1029
  %1047 = vmatpush.msra.mxu0 %v1028
  %1048 = vmatpush.msra.mxu0 %v1027
  %1049 = vmatpush.msra.mxu0 %v1026
  %1050 = vmatmul.f32.gmra.mxu0 %v645
  %v1051 = vpop.f32.mrf.mxu0
  %v1052 = vadd.f32 0.0, %v1051
  %1053 = vmatmul.f32.gmra.mxu0 %v647
  %v1054 = vpop.f32.mrf.mxu0
  %1055 = vmatmul.f32.gmra.mxu0 %v649
  %v1056 = vpop.f32.mrf.mxu0
  %v1057 = vadd.f32 0.0, %v1056
  %1058 = vmatmul.f32.gmra.mxu0 %v651
  %v1059 = vpop.f32.mrf.mxu0
  %1060 = vmatmul.f32.gmra.mxu0 %v1030
  %v1061 = vpop.f32.mrf.mxu0
  %v1062 = vadd.f32 0.0, %v1061
  %1063 = vmatmul.f32.gmra.mxu0 %v655
  %v1064 = vpop.f32.mrf.mxu0
  %v1065 = vadd.f32 0.0, %v1064
  %1066 = vmatmul.f32.gmra.mxu0 %v657
  %v1067 = vpop.f32.mrf.mxu0
  %1068 = vmatmul.f32.gmra.mxu0 %v659
  %v1069 = vpop.f32.mrf.mxu0
  %v1070 = vadd.f32 0.0, %v1069
  %1071 = vmatmul.f32.gmra.mxu0 %v661
  %v1072 = vpop.f32.mrf.mxu0
  %1073 = vmatmul.f32.gmra.mxu0 %v1032
  %v1074 = vpop.f32.mrf.mxu0
  %v1075 = vadd.f32 0.0, %v1074
  %1076 = vdwg.mxu0
  %v1077 = vadd.f32 %v1015, %v1052
  %v1078 = vadd.f32 %v1016, %v1057
  %v1079 = vadd.f32 %v1017, %v1062
  %v1080 = vadd.f32 %v1018, %v1065
  %v1081 = vadd.f32 %v1019, %v1070
  %v1082 = vadd.f32 %v1020, %v1075
  %v1083 = vrot.slane %v590, 2
  %v1084 = vsel %vm769, %v1083, %v771
  %v1085 = vrot.slane %v598, 2
  %v1086 = vsel %vm769, %v1085, %v771
  %s1087 = scalar_lea.vmem %s3, 192
  %v1088 = vld [vmem:[%s1087] sm:$0xff]
  %v1089 = vld [vmem:[%s1087 + $0x8] sm:$0xff]
  %v1090 = vld [vmem:[%s1087 + $0x10] sm:$0xff]
  %v1091 = vld [vmem:[%s1087 + $0x18] sm:$0xff]
  %v1092 = vsel %vm642, %v1084, 0
  %v1094 = vsel %vm642, %v1086, 0
  %1096 = vmatpush.msra.mxu0 0.0
  %1097 = vmatpush.msra.mxu0 0.0
  %1098 = vmatpush.msra.mxu0 0.0
  %1099 = vmatpush.msra.mxu0 0.0
  %1100 = vmatpush.msra.mxu0 0.0
  %1101 = vmatpush.msra.mxu0 0.0
  %1102 = vmatpush.msra.mxu0 0.0
  %1103 = vmatpush.msra.mxu0 0.0
  %1104 = vmatpush.msra.mxu0 0.0
  %1105 = vmatpush.msra.mxu0 0.0
  %1106 = vmatpush.msra.mxu0 0.0
  %1107 = vmatpush.msra.mxu0 0.0
  %1108 = vmatpush.msra.mxu0 %v1091
  %1109 = vmatpush.msra.mxu0 %v1090
  %1110 = vmatpush.msra.mxu0 %v1089
  %1111 = vmatpush.msra.mxu0 %v1088
  %1112 = vmatmul.f32.gmra.mxu0 %v798
  %v1113 = vpop.f32.mrf.mxu0
  %v1114 = vadd.f32 0.0, %v1113
  %1115 = vmatmul.f32.gmra.mxu0 %v800
  %v1116 = vpop.f32.mrf.mxu0
  %1117 = vmatmul.f32.gmra.mxu0 %v802
  %v1118 = vpop.f32.mrf.mxu0
  %v1119 = vadd.f32 0.0, %v1118
  %1120 = vmatmul.f32.gmra.mxu0 %v804
  %v1121 = vpop.f32.mrf.mxu0
  %1122 = vmatmul.f32.gmra.mxu0 %v1092
  %v1123 = vpop.f32.mrf.mxu0
  %v1124 = vadd.f32 0.0, %v1123
  %1125 = vmatmul.f32.gmra.mxu0 %v808
  %v1126 = vpop.f32.mrf.mxu0
  %v1127 = vadd.f32 0.0, %v1126
  %1128 = vmatmul.f32.gmra.mxu0 %v810
  %v1129 = vpop.f32.mrf.mxu0
  %1130 = vmatmul.f32.gmra.mxu0 %v812
  %v1131 = vpop.f32.mrf.mxu0
  %v1132 = vadd.f32 0.0, %v1131
  %1133 = vmatmul.f32.gmra.mxu0 %v814
  %v1134 = vpop.f32.mrf.mxu0
  %1135 = vmatmul.f32.gmra.mxu0 %v1094
  %v1136 = vpop.f32.mrf.mxu0
  %v1137 = vadd.f32 0.0, %v1136
  %1138 = vdwg.mxu0
  %v1139 = vadd.f32 %v1077, %v1114
  %v1140 = vadd.f32 %v1078, %v1119
  %v1141 = vadd.f32 %v1079, %v1124
  %v1142 = vadd.f32 %v1080, %v1127
  %v1143 = vadd.f32 %v1081, %v1132
  %v1144 = vadd.f32 %v1082, %v1137
  %v1145 = vrot.slane %v590, 3
  %v1146 = vsel %vm865, %v1145, %v867
  %v1147 = vrot.slane %v598, 3
  %v1148 = vsel %vm865, %v1147, %v867
  %s1149 = scalar_lea.vmem %s3, 224
  %v1150 = vld [vmem:[%s1149] sm:$0xff]
  %v1151 = vld [vmem:[%s1149 + $0x8] sm:$0xff]
  %v1152 = vld [vmem:[%s1149 + $0x10] sm:$0xff]
  %v1153 = vld [vmem:[%s1149 + $0x18] sm:$0xff]
  %v1154 = vsel %vm642, %v1146, 0
  %v1156 = vsel %vm642, %v1148, 0
  %1158 = vmatpush.msra.mxu0 0.0
  %1159 = vmatpush.msra.mxu0 0.0
  %1160 = vmatpush.msra.mxu0 0.0
  %1161 = vmatpush.msra.mxu0 0.0
  %1162 = vmatpush.msra.mxu0 0.0
  %1163 = vmatpush.msra.mxu0 0.0
  %1164 = vmatpush.msra.mxu0 0.0
  %1165 = vmatpush.msra.mxu0 0.0
  %1166 = vmatpush.msra.mxu0 0.0
  %1167 = vmatpush.msra.mxu0 0.0
  %1168 = vmatpush.msra.mxu0 0.0
  %1169 = vmatpush.msra.mxu0 0.0
  %1170 = vmatpush.msra.mxu0 %v1153
  %1171 = vmatpush.msra.mxu0 %v1152
  %1172 = vmatpush.msra.mxu0 %v1151
  %1173 = vmatpush.msra.mxu0 %v1150
  %1174 = vmatmul.f32.gmra.mxu0 %v894
  %v1175 = vpop.f32.mrf.mxu0
  %v1176 = vadd.f32 0.0, %v1175
  %1177 = vmatmul.f32.gmra.mxu0 %v896
  %v1178 = vpop.f32.mrf.mxu0
  %1179 = vmatmul.f32.gmra.mxu0 %v898
  %v1180 = vpop.f32.mrf.mxu0
  %v1181 = vadd.f32 0.0, %v1180
  %1182 = vmatmul.f32.gmra.mxu0 %v900
  %v1183 = vpop.f32.mrf.mxu0
  %1184 = vmatmul.f32.gmra.mxu0 %v1154
  %v1185 = vpop.f32.mrf.mxu0
  %v1186 = vadd.f32 0.0, %v1185
  %1187 = vmatmul.f32.gmra.mxu0 %v904
  %v1188 = vpop.f32.mrf.mxu0
  %v1189 = vadd.f32 0.0, %v1188
  %1190 = vmatmul.f32.gmra.mxu0 %v906
  %v1191 = vpop.f32.mrf.mxu0
  %1192 = vmatmul.f32.gmra.mxu0 %v908
  %v1193 = vpop.f32.mrf.mxu0
  %v1194 = vadd.f32 0.0, %v1193
  %1195 = vmatmul.f32.gmra.mxu0 %v910
  %v1196 = vpop.f32.mrf.mxu0
  %1197 = vmatmul.f32.gmra.mxu0 %v1156
  %v1198 = vpop.f32.mrf.mxu0
  %v1199 = vadd.f32 0.0, %v1198
  %1200 = vdwg.mxu0
  %v1201 = vadd.f32 %v1139, %v1176
  %v1202 = vadd.f32 %v1140, %v1181
  %v1203 = vadd.f32 %v1141, %v1186
  %v1204 = vadd.f32 %v1142, %v1189
  %v1205 = vadd.f32 %v1143, %v1194
  %v1206 = vadd.f32 %v1144, %v1199
  %s1207 = scalar_lea.vmem %s3, 256
  %v1208 = vld [vmem:[%s1207] sm:$0xff]
  %v1209 = vld [vmem:[%s1207 + $0x8] sm:$0xff]
  %v1210 = vld [vmem:[%s1207 + $0x10] sm:$0xff]
  %v1211 = vld [vmem:[%s1207 + $0x18] sm:$0xff]
  %v1213 = vsel %vm642, %v591, 0
  %v1216 = vsel %vm642, %v599, 0
  %1218 = vmatpush.msra.mxu0 0.0
  %1219 = vmatpush.msra.mxu0 0.0
  %1220 = vmatpush.msra.mxu0 0.0
  %1221 = vmatpush.msra.mxu0 0.0
  %1222 = vmatpush.msra.mxu0 0.0
  %1223 = vmatpush.msra.mxu0 0.0
  %1224 = vmatpush.msra.mxu0 0.0
  %1225 = vmatpush.msra.mxu0 0.0
  %1226 = vmatpush.msra.mxu0 0.0
  %1227 = vmatpush.msra.mxu0 0.0
  %1228 = vmatpush.msra.mxu0 0.0
  %1229 = vmatpush.msra.mxu0 0.0
  %1230 = vmatpush.msra.mxu0 %v1211
  %1231 = vmatpush.msra.mxu0 %v1210
  %1232 = vmatpush.msra.mxu0 %v1209
  %1233 = vmatpush.msra.mxu0 %v1208
  %1234 = vmatmul.f32.gmra.mxu0 %v710
  %v1235 = vpop.f32.mrf.mxu0
  %v1236 = vadd.f32 0.0, %v1235
  %1237 = vmatmul.f32.gmra.mxu0 %v712
  %v1238 = vpop.f32.mrf.mxu0
  %1239 = vmatmul.f32.gmra.mxu0 %v714
  %v1240 = vpop.f32.mrf.mxu0
  %v1241 = vadd.f32 0.0, %v1240
  %1242 = vmatmul.f32.gmra.mxu0 %v967
  %v1243 = vpop.f32.mrf.mxu0
  %1244 = vmatmul.f32.gmra.mxu0 %v1213
  %v1245 = vpop.f32.mrf.mxu0
  %v1246 = vadd.f32 0.0, %v1245
  %1247 = vmatmul.f32.gmra.mxu0 %v720
  %v1248 = vpop.f32.mrf.mxu0
  %v1249 = vadd.f32 0.0, %v1248
  %1250 = vmatmul.f32.gmra.mxu0 %v722
  %v1251 = vpop.f32.mrf.mxu0
  %1252 = vmatmul.f32.gmra.mxu0 %v724
  %v1253 = vpop.f32.mrf.mxu0
  %v1254 = vadd.f32 0.0, %v1253
  %1255 = vmatmul.f32.gmra.mxu0 %v970
  %v1256 = vpop.f32.mrf.mxu0
  %1257 = vmatmul.f32.gmra.mxu0 %v1216
  %v1258 = vpop.f32.mrf.mxu0
  %v1259 = vadd.f32 0.0, %v1258
  %1260 = vdwg.mxu0
  %v1261 = vadd.f32 %v1201, %v1236
  %v1262 = vadd.f32 %v1202, %v1241
  %v1263 = vadd.f32 %v1203, %v1246
  %v1264 = vadd.f32 %v1204, %v1249
  %v1265 = vadd.f32 %v1205, %v1254
  %v1266 = vadd.f32 %v1206, %v1259
  %v1267 = vrot.slane %v591, 1
  %v1268 = vsel %vm114, %v1267, %v617
  %v1269 = vrot.slane %v599, 1
  %v1270 = vsel %vm114, %v1269, %v617
  %s1271 = scalar_lea.vmem %s3, 288
  %v1272 = vld [vmem:[%s1271] sm:$0xff]
  %v1273 = vld [vmem:[%s1271 + $0x8] sm:$0xff]
  %v1274 = vld [vmem:[%s1271 + $0x10] sm:$0xff]
  %v1275 = vld [vmem:[%s1271 + $0x18] sm:$0xff]
  %v1276 = vsel %vm642, %v1268, 0
  %v1278 = vsel %vm642, %v1270, 0
  %1280 = vmatpush.msra.mxu0 0.0
  %1281 = vmatpush.msra.mxu0 0.0
  %1282 = vmatpush.msra.mxu0 0.0
  %1283 = vmatpush.msra.mxu0 0.0
  %1284 = vmatpush.msra.mxu0 0.0
  %1285 = vmatpush.msra.mxu0 0.0
  %1286 = vmatpush.msra.mxu0 0.0
  %1287 = vmatpush.msra.mxu0 0.0
  %1288 = vmatpush.msra.mxu0 0.0
  %1289 = vmatpush.msra.mxu0 0.0
  %1290 = vmatpush.msra.mxu0 0.0
  %1291 = vmatpush.msra.mxu0 0.0
  %1292 = vmatpush.msra.mxu0 %v1275
  %1293 = vmatpush.msra.mxu0 %v1274
  %1294 = vmatpush.msra.mxu0 %v1273
  %1295 = vmatpush.msra.mxu0 %v1272
  %1296 = vmatmul.f32.gmra.mxu0 %v647
  %v1297 = vpop.f32.mrf.mxu0
  %v1298 = vadd.f32 0.0, %v1297
  %1299 = vmatmul.f32.gmra.mxu0 %v649
  %v1300 = vpop.f32.mrf.mxu0
  %1301 = vmatmul.f32.gmra.mxu0 %v651
  %v1302 = vpop.f32.mrf.mxu0
  %v1303 = vadd.f32 0.0, %v1302
  %1304 = vmatmul.f32.gmra.mxu0 %v1030
  %v1305 = vpop.f32.mrf.mxu0
  %1306 = vmatmul.f32.gmra.mxu0 %v1276
  %v1307 = vpop.f32.mrf.mxu0
  %v1308 = vadd.f32 0.0, %v1307
  %1309 = vmatmul.f32.gmra.mxu0 %v657
  %v1310 = vpop.f32.mrf.mxu0
  %v1311 = vadd.f32 0.0, %v1310
  %1312 = vmatmul.f32.gmra.mxu0 %v659
  %v1313 = vpop.f32.mrf.mxu0
  %1314 = vmatmul.f32.gmra.mxu0 %v661
  %v1315 = vpop.f32.mrf.mxu0
  %v1316 = vadd.f32 0.0, %v1315
  %1317 = vmatmul.f32.gmra.mxu0 %v1032
  %v1318 = vpop.f32.mrf.mxu0
  %1319 = vmatmul.f32.gmra.mxu0 %v1278
  %v1320 = vpop.f32.mrf.mxu0
  %v1321 = vadd.f32 0.0, %v1320
  %1322 = vdwg.mxu0
  %v1323 = vadd.f32 %v1261, %v1298
  %v1324 = vadd.f32 %v1262, %v1303
  %v1325 = vadd.f32 %v1263, %v1308
  %v1326 = vadd.f32 %v1264, %v1311
  %v1327 = vadd.f32 %v1265, %v1316
  %v1328 = vadd.f32 %v1266, %v1321
  %v1329 = vrot.slane %v591, 2
  %v1330 = vsel %vm769, %v1329, %v771
  %v1331 = vrot.slane %v599, 2
  %v1332 = vsel %vm769, %v1331, %v771
  %s1333 = scalar_lea.vmem %s3, 320
  %v1334 = vld [vmem:[%s1333] sm:$0xff]
  %v1335 = vld [vmem:[%s1333 + $0x8] sm:$0xff]
  %v1336 = vld [vmem:[%s1333 + $0x10] sm:$0xff]
  %v1337 = vld [vmem:[%s1333 + $0x18] sm:$0xff]
  %v1338 = vsel %vm642, %v1330, 0
  %v1340 = vsel %vm642, %v1332, 0
  %1342 = vmatpush.msra.mxu0 0.0
  %1343 = vmatpush.msra.mxu0 0.0
  %1344 = vmatpush.msra.mxu0 0.0
  %1345 = vmatpush.msra.mxu0 0.0
  %1346 = vmatpush.msra.mxu0 0.0
  %1347 = vmatpush.msra.mxu0 0.0
  %1348 = vmatpush.msra.mxu0 0.0
  %1349 = vmatpush.msra.mxu0 0.0
  %1350 = vmatpush.msra.mxu0 0.0
  %1351 = vmatpush.msra.mxu0 0.0
  %1352 = vmatpush.msra.mxu0 0.0
  %1353 = vmatpush.msra.mxu0 0.0
  %1354 = vmatpush.msra.mxu0 %v1337
  %1355 = vmatpush.msra.mxu0 %v1336
  %1356 = vmatpush.msra.mxu0 %v1335
  %1357 = vmatpush.msra.mxu0 %v1334
  %1358 = vmatmul.f32.gmra.mxu0 %v800
  %v1359 = vpop.f32.mrf.mxu0
  %v1360 = vadd.f32 0.0, %v1359
  %1361 = vmatmul.f32.gmra.mxu0 %v802
  %v1362 = vpop.f32.mrf.mxu0
  %1363 = vmatmul.f32.gmra.mxu0 %v804
  %v1364 = vpop.f32.mrf.mxu0
  %v1365 = vadd.f32 0.0, %v1364
  %1366 = vmatmul.f32.gmra.mxu0 %v1092
  %v1367 = vpop.f32.mrf.mxu0
  %1368 = vmatmul.f32.gmra.mxu0 %v1338
  %v1369 = vpop.f32.mrf.mxu0
  %v1370 = vadd.f32 0.0, %v1369
  %1371 = vmatmul.f32.gmra.mxu0 %v810
  %v1372 = vpop.f32.mrf.mxu0
  %v1373 = vadd.f32 0.0, %v1372
  %1374 = vmatmul.f32.gmra.mxu0 %v812
  %v1375 = vpop.f32.mrf.mxu0
  %1376 = vmatmul.f32.gmra.mxu0 %v814
  %v1377 = vpop.f32.mrf.mxu0
  %v1378 = vadd.f32 0.0, %v1377
  %1379 = vmatmul.f32.gmra.mxu0 %v1094
  %v1380 = vpop.f32.mrf.mxu0
  %1381 = vmatmul.f32.gmra.mxu0 %v1340
  %v1382 = vpop.f32.mrf.mxu0
  %v1383 = vadd.f32 0.0, %v1382
  %1384 = vdwg.mxu0
  %v1385 = vadd.f32 %v1323, %v1360
  %v1386 = vadd.f32 %v1324, %v1365
  %v1387 = vadd.f32 %v1325, %v1370
  %v1388 = vadd.f32 %v1326, %v1373
  %v1389 = vadd.f32 %v1327, %v1378
  %v1390 = vadd.f32 %v1328, %v1383
  %v1391 = vrot.slane %v591, 3
  %v1392 = vsel %vm865, %v1391, %v867
  %v1393 = vrot.slane %v599, 3
  %v1394 = vsel %vm865, %v1393, %v867
  %s1395 = scalar_lea.vmem %s3, 352
  %v1396 = vld [vmem:[%s1395] sm:$0xff]
  %v1397 = vld [vmem:[%s1395 + $0x8] sm:$0xff]
  %v1398 = vld [vmem:[%s1395 + $0x10] sm:$0xff]
  %v1399 = vld [vmem:[%s1395 + $0x18] sm:$0xff]
  %v1400 = vsel %vm642, %v1392, 0
  %v1402 = vsel %vm642, %v1394, 0
  %1404 = vmatpush.msra.mxu0 0.0
  %1405 = vmatpush.msra.mxu0 0.0
  %1406 = vmatpush.msra.mxu0 0.0
  %1407 = vmatpush.msra.mxu0 0.0
  %1408 = vmatpush.msra.mxu0 0.0
  %1409 = vmatpush.msra.mxu0 0.0
  %1410 = vmatpush.msra.mxu0 0.0
  %1411 = vmatpush.msra.mxu0 0.0
  %1412 = vmatpush.msra.mxu0 0.0
  %1413 = vmatpush.msra.mxu0 0.0
  %1414 = vmatpush.msra.mxu0 0.0
  %1415 = vmatpush.msra.mxu0 0.0
  %1416 = vmatpush.msra.mxu0 %v1399
  %1417 = vmatpush.msra.mxu0 %v1398
  %1418 = vmatpush.msra.mxu0 %v1397
  %1419 = vmatpush.msra.mxu0 %v1396
  %1420 = vmatmul.f32.gmra.mxu0 %v896
  %v1421 = vpop.f32.mrf.mxu0
  %v1422 = vadd.f32 0.0, %v1421
  %1423 = vmatmul.f32.gmra.mxu0 %v898
  %v1424 = vpop.f32.mrf.mxu0
  %1425 = vmatmul.f32.gmra.mxu0 %v900
  %v1426 = vpop.f32.mrf.mxu0
  %v1427 = vadd.f32 0.0, %v1426
  %1428 = vmatmul.f32.gmra.mxu0 %v1154
  %v1429 = vpop.f32.mrf.mxu0
  %1430 = vmatmul.f32.gmra.mxu0 %v1400
  %v1431 = vpop.f32.mrf.mxu0
  %v1432 = vadd.f32 0.0, %v1431
  %1433 = vmatmul.f32.gmra.mxu0 %v906
  %v1434 = vpop.f32.mrf.mxu0
  %v1435 = vadd.f32 0.0, %v1434
  %1436 = vmatmul.f32.gmra.mxu0 %v908
  %v1437 = vpop.f32.mrf.mxu0
  %1438 = vmatmul.f32.gmra.mxu0 %v910
  %v1439 = vpop.f32.mrf.mxu0
  %v1440 = vadd.f32 0.0, %v1439
  %1441 = vmatmul.f32.gmra.mxu0 %v1156
  %v1442 = vpop.f32.mrf.mxu0
  %1443 = vmatmul.f32.gmra.mxu0 %v1402
  %v1444 = vpop.f32.mrf.mxu0
  %v1445 = vadd.f32 0.0, %v1444
  %1446 = vdwg.mxu0
  %v1447 = vadd.f32 %v1385, %v1422
  %v1448 = vadd.f32 %v1386, %v1427
  %v1449 = vadd.f32 %v1387, %v1432
  %v1450 = vadd.f32 %v1388, %v1435
  %v1451 = vadd.f32 %v1389, %v1440
  %v1452 = vadd.f32 %v1390, %v1445
  %s1453 = scalar_lea.vmem %s3, 384
  %v1454 = vld [vmem:[%s1453] sm:$0xff]
  %v1455 = vld [vmem:[%s1453 + $0x8] sm:$0xff]
  %v1456 = vld [vmem:[%s1453 + $0x10] sm:$0xff]
  %v1457 = vld [vmem:[%s1453 + $0x18] sm:$0xff]
  %v1459 = vsel %vm642, %v592, 0
  %v1462 = vsel %vm642, %v600, 0
  %1464 = vmatpush.msra.mxu0 0.0
  %1465 = vmatpush.msra.mxu0 0.0
  %1466 = vmatpush.msra.mxu0 0.0
  %1467 = vmatpush.msra.mxu0 0.0
  %1468 = vmatpush.msra.mxu0 0.0
  %1469 = vmatpush.msra.mxu0 0.0
  %1470 = vmatpush.msra.mxu0 0.0
  %1471 = vmatpush.msra.mxu0 0.0
  %1472 = vmatpush.msra.mxu0 0.0
  %1473 = vmatpush.msra.mxu0 0.0
  %1474 = vmatpush.msra.mxu0 0.0
  %1475 = vmatpush.msra.mxu0 0.0
  %1476 = vmatpush.msra.mxu0 %v1457
  %1477 = vmatpush.msra.mxu0 %v1456
  %1478 = vmatpush.msra.mxu0 %v1455
  %1479 = vmatpush.msra.mxu0 %v1454
  %1480 = vmatmul.f32.gmra.mxu0 %v712
  %v1481 = vpop.f32.mrf.mxu0
  %v1482 = vadd.f32 0.0, %v1481
  %1483 = vmatmul.f32.gmra.mxu0 %v714
  %v1484 = vpop.f32.mrf.mxu0
  %1485 = vmatmul.f32.gmra.mxu0 %v967
  %v1486 = vpop.f32.mrf.mxu0
  %v1487 = vadd.f32 0.0, %v1486
  %1488 = vmatmul.f32.gmra.mxu0 %v1213
  %v1489 = vpop.f32.mrf.mxu0
  %1490 = vmatmul.f32.gmra.mxu0 %v1459
  %v1491 = vpop.f32.mrf.mxu0
  %v1492 = vadd.f32 0.0, %v1491
  %1493 = vmatmul.f32.gmra.mxu0 %v722
  %v1494 = vpop.f32.mrf.mxu0
  %v1495 = vadd.f32 0.0, %v1494
  %1496 = vmatmul.f32.gmra.mxu0 %v724
  %v1497 = vpop.f32.mrf.mxu0
  %1498 = vmatmul.f32.gmra.mxu0 %v970
  %v1499 = vpop.f32.mrf.mxu0
  %v1500 = vadd.f32 0.0, %v1499
  %1501 = vmatmul.f32.gmra.mxu0 %v1216
  %v1502 = vpop.f32.mrf.mxu0
  %1503 = vmatmul.f32.gmra.mxu0 %v1462
  %v1504 = vpop.f32.mrf.mxu0
  %v1505 = vadd.f32 0.0, %v1504
  %1506 = vdwg.mxu0
  %v1507 = vadd.f32 %v1447, %v1482
  %v1508 = vadd.f32 %v1448, %v1487
  %v1509 = vadd.f32 %v1449, %v1492
  %v1510 = vadd.f32 %v1450, %v1495
  %v1511 = vadd.f32 %v1451, %v1500
  %v1512 = vadd.f32 %v1452, %v1505
  %v1513 = vrot.slane %v592, 1
  %v1514 = vsel %vm114, %v1513, %v617
  %v1515 = vrot.slane %v600, 1
  %v1516 = vsel %vm114, %v1515, %v617
  %s1517 = scalar_lea.vmem %s3, 416
  %v1518 = vld [vmem:[%s1517] sm:$0xff]
  %v1519 = vld [vmem:[%s1517 + $0x8] sm:$0xff]
  %v1520 = vld [vmem:[%s1517 + $0x10] sm:$0xff]
  %v1521 = vld [vmem:[%s1517 + $0x18] sm:$0xff]
  %v1522 = vsel %vm642, %v1514, 0
  %v1524 = vsel %vm642, %v1516, 0
  %1526 = vmatpush.msra.mxu0 0.0
  %1527 = vmatpush.msra.mxu0 0.0
  %1528 = vmatpush.msra.mxu0 0.0
  %1529 = vmatpush.msra.mxu0 0.0
  %1530 = vmatpush.msra.mxu0 0.0
  %1531 = vmatpush.msra.mxu0 0.0
  %1532 = vmatpush.msra.mxu0 0.0
  %1533 = vmatpush.msra.mxu0 0.0
  %1534 = vmatpush.msra.mxu0 0.0
  %1535 = vmatpush.msra.mxu0 0.0
  %1536 = vmatpush.msra.mxu0 0.0
  %1537 = vmatpush.msra.mxu0 0.0
  %1538 = vmatpush.msra.mxu0 %v1521
  %1539 = vmatpush.msra.mxu0 %v1520
  %1540 = vmatpush.msra.mxu0 %v1519
  %1541 = vmatpush.msra.mxu0 %v1518
  %1542 = vmatmul.f32.gmra.mxu0 %v649
  %v1543 = vpop.f32.mrf.mxu0
  %v1544 = vadd.f32 0.0, %v1543
  %1545 = vmatmul.f32.gmra.mxu0 %v651
  %v1546 = vpop.f32.mrf.mxu0
  %1547 = vmatmul.f32.gmra.mxu0 %v1030
  %v1548 = vpop.f32.mrf.mxu0
  %v1549 = vadd.f32 0.0, %v1548
  %1550 = vmatmul.f32.gmra.mxu0 %v1276
  %v1551 = vpop.f32.mrf.mxu0
  %1552 = vmatmul.f32.gmra.mxu0 %v1522
  %v1553 = vpop.f32.mrf.mxu0
  %v1554 = vadd.f32 0.0, %v1553
  %1555 = vmatmul.f32.gmra.mxu0 %v659
  %v1556 = vpop.f32.mrf.mxu0
  %v1557 = vadd.f32 0.0, %v1556
  %1558 = vmatmul.f32.gmra.mxu0 %v661
  %v1559 = vpop.f32.mrf.mxu0
  %1560 = vmatmul.f32.gmra.mxu0 %v1032
  %v1561 = vpop.f32.mrf.mxu0
  %v1562 = vadd.f32 0.0, %v1561
  %1563 = vmatmul.f32.gmra.mxu0 %v1278
  %v1564 = vpop.f32.mrf.mxu0
  %1565 = vmatmul.f32.gmra.mxu0 %v1524
  %v1566 = vpop.f32.mrf.mxu0
  %v1567 = vadd.f32 0.0, %v1566
  %1568 = vdwg.mxu0
  %v1569 = vadd.f32 %v1507, %v1544
  %v1570 = vadd.f32 %v1508, %v1549
  %v1571 = vadd.f32 %v1509, %v1554
  %v1572 = vadd.f32 %v1510, %v1557
  %v1573 = vadd.f32 %v1511, %v1562
  %v1574 = vadd.f32 %v1512, %v1567
  %v1575 = vrot.slane %v592, 2
  %v1576 = vsel %vm769, %v1575, %v771
  %v1577 = vrot.slane %v600, 2
  %v1578 = vsel %vm769, %v1577, %v771
  %s1579 = scalar_lea.vmem %s3, 448
  %v1580 = vld [vmem:[%s1579] sm:$0xff]
  %v1581 = vld [vmem:[%s1579 + $0x8] sm:$0xff]
  %v1582 = vld [vmem:[%s1579 + $0x10] sm:$0xff]
  %v1583 = vld [vmem:[%s1579 + $0x18] sm:$0xff]
  %v1584 = vsel %vm642, %v1576, 0
  %v1586 = vsel %vm642, %v1578, 0
  %1588 = vmatpush.msra.mxu0 0.0
  %1589 = vmatpush.msra.mxu0 0.0
  %1590 = vmatpush.msra.mxu0 0.0
  %1591 = vmatpush.msra.mxu0 0.0
  %1592 = vmatpush.msra.mxu0 0.0
  %1593 = vmatpush.msra.mxu0 0.0
  %1594 = vmatpush.msra.mxu0 0.0
  %1595 = vmatpush.msra.mxu0 0.0
  %1596 = vmatpush.msra.mxu0 0.0
  %1597 = vmatpush.msra.mxu0 0.0
  %1598 = vmatpush.msra.mxu0 0.0
  %1599 = vmatpush.msra.mxu0 0.0
  %1600 = vmatpush.msra.mxu0 %v1583
  %1601 = vmatpush.msra.mxu0 %v1582
  %1602 = vmatpush.msra.mxu0 %v1581
  %1603 = vmatpush.msra.mxu0 %v1580
  %1604 = vmatmul.f32.gmra.mxu0 %v802
  %v1605 = vpop.f32.mrf.mxu0
  %v1606 = vadd.f32 0.0, %v1605
  %1607 = vmatmul.f32.gmra.mxu0 %v804
  %v1608 = vpop.f32.mrf.mxu0
  %1609 = vmatmul.f32.gmra.mxu0 %v1092
  %v1610 = vpop.f32.mrf.mxu0
  %v1611 = vadd.f32 0.0, %v1610
  %1612 = vmatmul.f32.gmra.mxu0 %v1338
  %v1613 = vpop.f32.mrf.mxu0
  %1614 = vmatmul.f32.gmra.mxu0 %v1584
  %v1615 = vpop.f32.mrf.mxu0
  %v1616 = vadd.f32 0.0, %v1615
  %1617 = vmatmul.f32.gmra.mxu0 %v812
  %v1618 = vpop.f32.mrf.mxu0
  %v1619 = vadd.f32 0.0, %v1618
  %1620 = vmatmul.f32.gmra.mxu0 %v814
  %v1621 = vpop.f32.mrf.mxu0
  %1622 = vmatmul.f32.gmra.mxu0 %v1094
  %v1623 = vpop.f32.mrf.mxu0
  %v1624 = vadd.f32 0.0, %v1623
  %1625 = vmatmul.f32.gmra.mxu0 %v1340
  %v1626 = vpop.f32.mrf.mxu0
  %1627 = vmatmul.f32.gmra.mxu0 %v1586
  %v1628 = vpop.f32.mrf.mxu0
  %v1629 = vadd.f32 0.0, %v1628
  %1630 = vdwg.mxu0
  %v1631 = vadd.f32 %v1569, %v1606
  %v1632 = vadd.f32 %v1570, %v1611
  %v1633 = vadd.f32 %v1571, %v1616
  %v1634 = vadd.f32 %v1572, %v1619
  %v1635 = vadd.f32 %v1573, %v1624
  %v1636 = vadd.f32 %v1574, %v1629
  %v1637 = vrot.slane %v592, 3
  %v1638 = vsel %vm865, %v1637, %v867
  %v1639 = vrot.slane %v600, 3
  %v1640 = vsel %vm865, %v1639, %v867
  %s1641 = scalar_lea.vmem %s3, 480
  %v1642 = vld [vmem:[%s1641] sm:$0xff]
  %v1643 = vld [vmem:[%s1641 + $0x8] sm:$0xff]
  %v1644 = vld [vmem:[%s1641 + $0x10] sm:$0xff]
  %v1645 = vld [vmem:[%s1641 + $0x18] sm:$0xff]
  %v1646 = vsel %vm642, %v1638, 0
  %v1648 = vsel %vm642, %v1640, 0
  %1650 = vmatpush.msra.mxu0 0.0
  %1651 = vmatpush.msra.mxu0 0.0
  %1652 = vmatpush.msra.mxu0 0.0
  %1653 = vmatpush.msra.mxu0 0.0
  %1654 = vmatpush.msra.mxu0 0.0
  %1655 = vmatpush.msra.mxu0 0.0
  %1656 = vmatpush.msra.mxu0 0.0
  %1657 = vmatpush.msra.mxu0 0.0
  %1658 = vmatpush.msra.mxu0 0.0
  %1659 = vmatpush.msra.mxu0 0.0
  %1660 = vmatpush.msra.mxu0 0.0
  %1661 = vmatpush.msra.mxu0 0.0
  %1662 = vmatpush.msra.mxu0 %v1645
  %1663 = vmatpush.msra.mxu0 %v1644
  %1664 = vmatpush.msra.mxu0 %v1643
  %1665 = vmatpush.msra.mxu0 %v1642
  %1666 = vmatmul.f32.gmra.mxu0 %v898
  %v1667 = vpop.f32.mrf.mxu0
  %v1668 = vadd.f32 0.0, %v1667
  %1669 = vmatmul.f32.gmra.mxu0 %v900
  %v1670 = vpop.f32.mrf.mxu0
  %1671 = vmatmul.f32.gmra.mxu0 %v1154
  %v1672 = vpop.f32.mrf.mxu0
  %v1673 = vadd.f32 0.0, %v1672
  %1674 = vmatmul.f32.gmra.mxu0 %v1400
  %v1675 = vpop.f32.mrf.mxu0
  %1676 = vmatmul.f32.gmra.mxu0 %v1646
  %v1677 = vpop.f32.mrf.mxu0
  %v1678 = vadd.f32 0.0, %v1677
  %1679 = vmatmul.f32.gmra.mxu0 %v908
  %v1680 = vpop.f32.mrf.mxu0
  %v1681 = vadd.f32 0.0, %v1680
  %1682 = vmatmul.f32.gmra.mxu0 %v910
  %v1683 = vpop.f32.mrf.mxu0
  %1684 = vmatmul.f32.gmra.mxu0 %v1156
  %v1685 = vpop.f32.mrf.mxu0
  %v1686 = vadd.f32 0.0, %v1685
  %1687 = vmatmul.f32.gmra.mxu0 %v1402
  %v1688 = vpop.f32.mrf.mxu0
  %1689 = vmatmul.f32.gmra.mxu0 %v1648
  %v1690 = vpop.f32.mrf.mxu0
  %v1691 = vadd.f32 0.0, %v1690
  %1692 = vdwg.mxu0
  %v1693 = vadd.f32 %v1631, %v1668
  %v1694 = vadd.f32 %v1632, %v1673
  %v1695 = vadd.f32 %v1633, %v1678
  %v1696 = vadd.f32 %v1634, %v1681
  %v1697 = vadd.f32 %v1635, %v1686
  %v1698 = vadd.f32 %v1636, %v1691
  %v1699 = vld [vmem:[%s4] sm:$0x1]
  %v1701 = vperm.slane %v1699, 0
  %v1703 = vadd.f32 %v1693, %v1701
  %v1704 = vadd.f32 %v1694, %v1701
  %v1705 = vadd.f32 %v1695, %v1701
  %v1706 = vadd.f32 %v1696, %v1701
  %v1707 = vadd.f32 %v1697, %v1701
  %v1708 = vadd.f32 %v1698, %v1701
  %v1709 = vmax.f32 %v1703, 0.0
  %v1710 = vmax.f32 %v1704, 0.0
  %v1711 = vmax.f32 %v1705, 0.0
  %v1712 = vmax.f32 %v1706, 0.0
  %v1713 = vmax.f32 %v1707, 0.0
  %v1714 = vmax.f32 %v1708, 0.0
  %v1715 = vld [vmem:[%s5] sm:$0xff]
  %v1716 = vld [vmem:[%s5 + $0x8] sm:$0xff]
  %v1717 = vld [vmem:[%s5 + $0x10] sm:$0xff]
  %v1718 = vld [vmem:[%s5 + $0x18] sm:$0xff]
  %v1719 = vld [vmem:[%s5 + $0x20] sm:$0xff]
  %v1720 = vld [vmem:[%s5 + $0x28] sm:$0xff]
  %v1721 = vld [vmem:[%s5 + $0x30] sm:$0xff]
  %v1722 = vld [vmem:[%s5 + $0x38] sm:$0xff]
  %s1723 = scalar_lea.vmem %s5, 64
  %v1724 = vld [vmem:[%s1723] sm:$0xff]
  %v1725 = vld [vmem:[%s1723 + $0x8] sm:$0xff]
  %v1726 = vld [vmem:[%s1723 + $0x10] sm:$0xff]
  %v1727 = vld [vmem:[%s1723 + $0x18] sm:$0xff]
  %v1728 = vld [vmem:[%s1723 + $0x20] sm:$0xff]
  %v1729 = vld [vmem:[%s1723 + $0x28] sm:$0xff]
  %v1730 = vld [vmem:[%s1723 + $0x30] sm:$0xff]
  %v1731 = vld [vmem:[%s1723 + $0x38] sm:$0xff]
  %v1734 = vrot.slane %v1709, 2
  %v1735 = vrot.slane %v1712, 1
  %vm1736 = vcmask 1041409
  %v1737 = vsel %vm1736, %v1735, %v1734
  %v1738 = vsel %vm172, %v1737, 0
  %1740 = vmatpush.msra.mxu0 0.0
  %1741 = vmatpush.msra.mxu0 0.0
  %1742 = vmatpush.msra.mxu0 0.0
  %1743 = vmatpush.msra.mxu0 0.0
  %1744 = vmatpush.msra.mxu0 0.0
  %1745 = vmatpush.msra.mxu0 0.0
  %1746 = vmatpush.msra.mxu0 0.0
  %1747 = vmatpush.msra.mxu0 0.0
  %1748 = vmatpush.msra.mxu0 %v1731
  %1749 = vmatpush.msra.mxu0 %v1730
  %1750 = vmatpush.msra.mxu0 %v1729
  %1751 = vmatpush.msra.mxu0 %v1728
  %1752 = vmatpush.msra.mxu0 %v1727
  %1753 = vmatpush.msra.mxu0 %v1726
  %1754 = vmatpush.msra.mxu0 %v1725
  %1755 = vmatpush.msra.mxu0 %v1724
  %1756 = vmatmul.f32.gmra.mxu0 %v1738
  %v1757 = vpop.f32.mrf.mxu0
  %v1758 = vadd.f32 0.0, %v1757
  %1759 = vdwg.mxu0
  %v1760 = vrot.slane %v1712, 7
  %v1761 = vsel %vm1736, %v1760, %v1709
  %v1762 = vsel %vm172, %v1761, 0
  %1764 = vmatpush.msra.mxu0 0.0
  %1765 = vmatpush.msra.mxu0 0.0
  %1766 = vmatpush.msra.mxu0 0.0
  %1767 = vmatpush.msra.mxu0 0.0
  %1768 = vmatpush.msra.mxu0 0.0
  %1769 = vmatpush.msra.mxu0 0.0
  %1770 = vmatpush.msra.mxu0 0.0
  %1771 = vmatpush.msra.mxu0 0.0
  %1772 = vmatpush.msra.mxu0 %v1722
  %1773 = vmatpush.msra.mxu0 %v1721
  %1774 = vmatpush.msra.mxu0 %v1720
  %1775 = vmatpush.msra.mxu0 %v1719
  %1776 = vmatpush.msra.mxu0 %v1718
  %1777 = vmatpush.msra.mxu0 %v1717
  %1778 = vmatpush.msra.mxu0 %v1716
  %1779 = vmatpush.msra.mxu0 %v1715
  %1780 = vmatmul.f32.gmra.mxu0 %v1762
  %v1781 = vpop.f32.mrf.mxu0
  %v1782 = vadd.f32 %v1758, %v1781
  %1783 = vdwg.mxu0
  %s1784 = scalar_lea.vmem %s5, 128
  %v1785 = vld [vmem:[%s1784] sm:$0xff]
  %v1786 = vld [vmem:[%s1784 + $0x8] sm:$0xff]
  %v1787 = vld [vmem:[%s1784 + $0x10] sm:$0xff]
  %v1788 = vld [vmem:[%s1784 + $0x18] sm:$0xff]
  %v1789 = vld [vmem:[%s1784 + $0x20] sm:$0xff]
  %v1790 = vld [vmem:[%s1784 + $0x28] sm:$0xff]
  %v1791 = vld [vmem:[%s1784 + $0x30] sm:$0xff]
  %v1792 = vld [vmem:[%s1784 + $0x38] sm:$0xff]
  %v1793 = vrot.slane %v1709, 4
  %v1794 = vrot.slane %v1712, 3
  %v1795 = vsel %vm1736, %v1794, %v1793
  %v1796 = vsel %vm172, %v1795, 0
  %1798 = vmatpush.msra.mxu0 0.0
  %1799 = vmatpush.msra.mxu0 0.0
  %1800 = vmatpush.msra.mxu0 0.0
  %1801 = vmatpush.msra.mxu0 0.0
  %1802 = vmatpush.msra.mxu0 0.0
  %1803 = vmatpush.msra.mxu0 0.0
  %1804 = vmatpush.msra.mxu0 0.0
  %1805 = vmatpush.msra.mxu0 0.0
  %1806 = vmatpush.msra.mxu0 %v1792
  %1807 = vmatpush.msra.mxu0 %v1791
  %1808 = vmatpush.msra.mxu0 %v1790
  %1809 = vmatpush.msra.mxu0 %v1789
  %1810 = vmatpush.msra.mxu0 %v1788
  %1811 = vmatpush.msra.mxu0 %v1787
  %1812 = vmatpush.msra.mxu0 %v1786
  %1813 = vmatpush.msra.mxu0 %v1785
  %1814 = vmatmul.f32.gmra.mxu0 %v1796
  %v1815 = vpop.f32.mrf.mxu0
  %v1816 = vadd.f32 0.0, %v1815
  %1817 = vdwg.mxu0
  %v1818 = vadd.f32 %v1782, %v1816
  %s1819 = scalar_lea.vmem %s5, 192
  %v1820 = vld [vmem:[%s1819] sm:$0xff]
  %v1821 = vld [vmem:[%s1819 + $0x8] sm:$0xff]
  %v1822 = vld [vmem:[%s1819 + $0x10] sm:$0xff]
  %v1823 = vld [vmem:[%s1819 + $0x18] sm:$0xff]
  %v1824 = vld [vmem:[%s1819 + $0x20] sm:$0xff]
  %v1825 = vld [vmem:[%s1819 + $0x28] sm:$0xff]
  %v1826 = vld [vmem:[%s1819 + $0x30] sm:$0xff]
  %v1827 = vld [vmem:[%s1819 + $0x38] sm:$0xff]
  %v1830 = vrot.slane %v1713, 7
  %v1831 = vsel %vm1736, %v1830, %v1710
  %v1832 = vsel %vm172, %v1831, 0
  %1834 = vmatpush.msra.mxu0 0.0
  %1835 = vmatpush.msra.mxu0 0.0
  %1836 = vmatpush.msra.mxu0 0.0
  %1837 = vmatpush.msra.mxu0 0.0
  %1838 = vmatpush.msra.mxu0 0.0
  %1839 = vmatpush.msra.mxu0 0.0
  %1840 = vmatpush.msra.mxu0 0.0
  %1841 = vmatpush.msra.mxu0 0.0
  %1842 = vmatpush.msra.mxu0 %v1827
  %1843 = vmatpush.msra.mxu0 %v1826
  %1844 = vmatpush.msra.mxu0 %v1825
  %1845 = vmatpush.msra.mxu0 %v1824
  %1846 = vmatpush.msra.mxu0 %v1823
  %1847 = vmatpush.msra.mxu0 %v1822
  %1848 = vmatpush.msra.mxu0 %v1821
  %1849 = vmatpush.msra.mxu0 %v1820
  %1850 = vmatmul.f32.gmra.mxu0 %v1832
  %v1851 = vpop.f32.mrf.mxu0
  %v1852 = vadd.f32 0.0, %v1851
  %1853 = vdwg.mxu0
  %v1854 = vadd.f32 %v1818, %v1852
  %s1855 = scalar_lea.vmem %s5, 256
  %v1856 = vld [vmem:[%s1855] sm:$0xff]
  %v1857 = vld [vmem:[%s1855 + $0x8] sm:$0xff]
  %v1858 = vld [vmem:[%s1855 + $0x10] sm:$0xff]
  %v1859 = vld [vmem:[%s1855 + $0x18] sm:$0xff]
  %v1860 = vld [vmem:[%s1855 + $0x20] sm:$0xff]
  %v1861 = vld [vmem:[%s1855 + $0x28] sm:$0xff]
  %v1862 = vld [vmem:[%s1855 + $0x30] sm:$0xff]
  %v1863 = vld [vmem:[%s1855 + $0x38] sm:$0xff]
  %v1864 = vrot.slane %v1710, 2
  %v1865 = vrot.slane %v1713, 1
  %v1866 = vsel %vm1736, %v1865, %v1864
  %v1867 = vsel %vm172, %v1866, 0
  %1869 = vmatpush.msra.mxu0 0.0
  %1870 = vmatpush.msra.mxu0 0.0
  %1871 = vmatpush.msra.mxu0 0.0
  %1872 = vmatpush.msra.mxu0 0.0
  %1873 = vmatpush.msra.mxu0 0.0
  %1874 = vmatpush.msra.mxu0 0.0
  %1875 = vmatpush.msra.mxu0 0.0
  %1876 = vmatpush.msra.mxu0 0.0
  %1877 = vmatpush.msra.mxu0 %v1863
  %1878 = vmatpush.msra.mxu0 %v1862
  %1879 = vmatpush.msra.mxu0 %v1861
  %1880 = vmatpush.msra.mxu0 %v1860
  %1881 = vmatpush.msra.mxu0 %v1859
  %1882 = vmatpush.msra.mxu0 %v1858
  %1883 = vmatpush.msra.mxu0 %v1857
  %1884 = vmatpush.msra.mxu0 %v1856
  %1885 = vmatmul.f32.gmra.mxu0 %v1867
  %v1886 = vpop.f32.mrf.mxu0
  %v1887 = vadd.f32 0.0, %v1886
  %1888 = vdwg.mxu0
  %v1889 = vadd.f32 %v1854, %v1887
  %s1890 = scalar_lea.vmem %s5, 320
  %v1891 = vld [vmem:[%s1890] sm:$0xff]
  %v1892 = vld [vmem:[%s1890 + $0x8] sm:$0xff]
  %v1893 = vld [vmem:[%s1890 + $0x10] sm:$0xff]
  %v1894 = vld [vmem:[%s1890 + $0x18] sm:$0xff]
  %v1895 = vld [vmem:[%s1890 + $0x20] sm:$0xff]
  %v1896 = vld [vmem:[%s1890 + $0x28] sm:$0xff]
  %v1897 = vld [vmem:[%s1890 + $0x30] sm:$0xff]
  %v1898 = vld [vmem:[%s1890 + $0x38] sm:$0xff]
  %v1899 = vrot.slane %v1710, 4
  %v1900 = vrot.slane %v1713, 3
  %v1901 = vsel %vm1736, %v1900, %v1899
  %v1902 = vsel %vm172, %v1901, 0
  %1904 = vmatpush.msra.mxu0 0.0
  %1905 = vmatpush.msra.mxu0 0.0
  %1906 = vmatpush.msra.mxu0 0.0
  %1907 = vmatpush.msra.mxu0 0.0
  %1908 = vmatpush.msra.mxu0 0.0
  %1909 = vmatpush.msra.mxu0 0.0
  %1910 = vmatpush.msra.mxu0 0.0
  %1911 = vmatpush.msra.mxu0 0.0
  %1912 = vmatpush.msra.mxu0 %v1898
  %1913 = vmatpush.msra.mxu0 %v1897
  %1914 = vmatpush.msra.mxu0 %v1896
  %1915 = vmatpush.msra.mxu0 %v1895
  %1916 = vmatpush.msra.mxu0 %v1894
  %1917 = vmatpush.msra.mxu0 %v1893
  %1918 = vmatpush.msra.mxu0 %v1892
  %1919 = vmatpush.msra.mxu0 %v1891
  %1920 = vmatmul.f32.gmra.mxu0 %v1902
  %v1921 = vpop.f32.mrf.mxu0
  %v1922 = vadd.f32 0.0, %v1921
  %1923 = vdwg.mxu0
  %v1924 = vadd.f32 %v1889, %v1922
  %s1925 = scalar_lea.vmem %s5, 384
  %v1926 = vld [vmem:[%s1925] sm:$0xff]
  %v1927 = vld [vmem:[%s1925 + $0x8] sm:$0xff]
  %v1928 = vld [vmem:[%s1925 + $0x10] sm:$0xff]
  %v1929 = vld [vmem:[%s1925 + $0x18] sm:$0xff]
  %v1930 = vld [vmem:[%s1925 + $0x20] sm:$0xff]
  %v1931 = vld [vmem:[%s1925 + $0x28] sm:$0xff]
  %v1932 = vld [vmem:[%s1925 + $0x30] sm:$0xff]
  %v1933 = vld [vmem:[%s1925 + $0x38] sm:$0xff]
  %v1936 = vrot.slane %v1714, 7
  %v1937 = vsel %vm1736, %v1936, %v1711
  %v1938 = vsel %vm172, %v1937, 0
  %1940 = vmatpush.msra.mxu0 0.0
  %1941 = vmatpush.msra.mxu0 0.0
  %1942 = vmatpush.msra.mxu0 0.0
  %1943 = vmatpush.msra.mxu0 0.0
  %1944 = vmatpush.msra.mxu0 0.0
  %1945 = vmatpush.msra.mxu0 0.0
  %1946 = vmatpush.msra.mxu0 0.0
  %1947 = vmatpush.msra.mxu0 0.0
  %1948 = vmatpush.msra.mxu0 %v1933
  %1949 = vmatpush.msra.mxu0 %v1932
  %1950 = vmatpush.msra.mxu0 %v1931
  %1951 = vmatpush.msra.mxu0 %v1930
  %1952 = vmatpush.msra.mxu0 %v1929
  %1953 = vmatpush.msra.mxu0 %v1928
  %1954 = vmatpush.msra.mxu0 %v1927
  %1955 = vmatpush.msra.mxu0 %v1926
  %1956 = vmatmul.f32.gmra.mxu0 %v1938
  %v1957 = vpop.f32.mrf.mxu0
  %v1958 = vadd.f32 0.0, %v1957
  %1959 = vdwg.mxu0
  %v1960 = vadd.f32 %v1924, %v1958
  %s1961 = scalar_lea.vmem %s5, 448
  %v1962 = vld [vmem:[%s1961] sm:$0xff]
  %v1963 = vld [vmem:[%s1961 + $0x8] sm:$0xff]
  %v1964 = vld [vmem:[%s1961 + $0x10] sm:$0xff]
  %v1965 = vld [vmem:[%s1961 + $0x18] sm:$0xff]
  %v1966 = vld [vmem:[%s1961 + $0x20] sm:$0xff]
  %v1967 = vld [vmem:[%s1961 + $0x28] sm:$0xff]
  %v1968 = vld [vmem:[%s1961 + $0x30] sm:$0xff]
  %v1969 = vld [vmem:[%s1961 + $0x38] sm:$0xff]
  %v1970 = vrot.slane %v1711, 2
  %v1971 = vrot.slane %v1714, 1
  %v1972 = vsel %vm1736, %v1971, %v1970
  %v1973 = vsel %vm172, %v1972, 0
  %1975 = vmatpush.msra.mxu0 0.0
  %1976 = vmatpush.msra.mxu0 0.0
  %1977 = vmatpush.msra.mxu0 0.0
  %1978 = vmatpush.msra.mxu0 0.0
  %1979 = vmatpush.msra.mxu0 0.0
  %1980 = vmatpush.msra.mxu0 0.0
  %1981 = vmatpush.msra.mxu0 0.0
  %1982 = vmatpush.msra.mxu0 0.0
  %1983 = vmatpush.msra.mxu0 %v1969
  %1984 = vmatpush.msra.mxu0 %v1968
  %1985 = vmatpush.msra.mxu0 %v1967
  %1986 = vmatpush.msra.mxu0 %v1966
  %1987 = vmatpush.msra.mxu0 %v1965
  %1988 = vmatpush.msra.mxu0 %v1964
  %1989 = vmatpush.msra.mxu0 %v1963
  %1990 = vmatpush.msra.mxu0 %v1962
  %1991 = vmatmul.f32.gmra.mxu0 %v1973
  %v1992 = vpop.f32.mrf.mxu0
  %v1993 = vadd.f32 0.0, %v1992
  %1994 = vdwg.mxu0
  %v1995 = vadd.f32 %v1960, %v1993
  %s1996 = scalar_lea.vmem %s5, 512
  %v1997 = vld [vmem:[%s1996] sm:$0xff]
  %v1998 = vld [vmem:[%s1996 + $0x8] sm:$0xff]
  %v1999 = vld [vmem:[%s1996 + $0x10] sm:$0xff]
  %v2000 = vld [vmem:[%s1996 + $0x18] sm:$0xff]
  %v2001 = vld [vmem:[%s1996 + $0x20] sm:$0xff]
  %v2002 = vld [vmem:[%s1996 + $0x28] sm:$0xff]
  %v2003 = vld [vmem:[%s1996 + $0x30] sm:$0xff]
  %v2004 = vld [vmem:[%s1996 + $0x38] sm:$0xff]
  %v2005 = vrot.slane %v1711, 4
  %v2006 = vrot.slane %v1714, 3
  %v2007 = vsel %vm1736, %v2006, %v2005
  %v2008 = vsel %vm172, %v2007, 0
  %2010 = vmatpush.msra.mxu0 0.0
  %2011 = vmatpush.msra.mxu0 0.0
  %2012 = vmatpush.msra.mxu0 0.0
  %2013 = vmatpush.msra.mxu0 0.0
  %2014 = vmatpush.msra.mxu0 0.0
  %2015 = vmatpush.msra.mxu0 0.0
  %2016 = vmatpush.msra.mxu0 0.0
  %2017 = vmatpush.msra.mxu0 0.0
  %2018 = vmatpush.msra.mxu0 %v2004
  %2019 = vmatpush.msra.mxu0 %v2003
  %2020 = vmatpush.msra.mxu0 %v2002
  %2021 = vmatpush.msra.mxu0 %v2001
  %2022 = vmatpush.msra.mxu0 %v2000
  %2023 = vmatpush.msra.mxu0 %v1999
  %2024 = vmatpush.msra.mxu0 %v1998
  %2025 = vmatpush.msra.mxu0 %v1997
  %2026 = vmatmul.f32.gmra.mxu0 %v2008
  %v2027 = vpop.f32.mrf.mxu0
  %v2028 = vadd.f32 0.0, %v2027
  %2029 = vdwg.mxu0
  %v2030 = vadd.f32 %v1995, %v2028
  %v2031 = vld [vmem:[%s6] sm:$0x1]
  %v2033 = vperm.slane %v2031, 0
  %v2035 = vadd.f32 %v2030, %v2033
  %v2036 = vmax.f32 %v2035, 0.0
  %v2037 = vld [vmem:[%s7] sm:$0xff]
  %v2038 = vld [vmem:[%s7 + $0x8] sm:$0xff]
  %v2039 = vld [vmem:[%s7 + $0x10] sm:$0xff]
  %v2040 = vld [vmem:[%s7 + $0x18] sm:$0xff]
  %v2041 = vld [vmem:[%s7 + $0x20] sm:$0xff]
  %v2042 = vld [vmem:[%s7 + $0x28] sm:$0xff]
  %v2043 = vld [vmem:[%s7 + $0x30] sm:$0xff]
  %v2044 = vld [vmem:[%s7 + $0x38] sm:$0xff]
  %v2045 = vld [vmem:[%s7 + $0x40] sm:$0xff]
  %v2046 = vld [vmem:[%s7 + $0x48] sm:$0xff]
  %v2047 = vld [vmem:[%s7 + $0x50] sm:$0xff]
  %v2048 = vld [vmem:[%s7 + $0x58] sm:$0xff]
  %v2049 = vld [vmem:[%s7 + $0x60] sm:$0xff]
  %v2050 = vld [vmem:[%s7 + $0x68] sm:$0xff]
  %v2051 = vld [vmem:[%s7 + $0x70] sm:$0xff]
  %v2052 = vld [vmem:[%s7 + $0x78] sm:$0xff]
  %v2053 = vld [vmem:[%s7 + $0x80] sm:$0xff]
  %v2054 = vld [vmem:[%s7 + $0x88] sm:$0xff]
  %v2055 = vld [vmem:[%s7 + $0x90] sm:$0xff]
  %v2056 = vld [vmem:[%s7 + $0x98] sm:$0xff]
  %v2057 = vld [vmem:[%s7 + $0xa0] sm:$0xff]
  %v2058 = vld [vmem:[%s7 + $0xa8] sm:$0xff]
  %v2059 = vld [vmem:[%s7 + $0xb0] sm:$0xff]
  %v2060 = vld [vmem:[%s7 + $0xb8] sm:$0xff]
  %v2061 = vld [vmem:[%s7 + $0xc0] sm:$0xff]
  %v2062 = vld [vmem:[%s7 + $0xc8] sm:$0xff]
  %v2063 = vld [vmem:[%s7 + $0xd0] sm:$0xff]
  %v2064 = vld [vmem:[%s7 + $0xd8] sm:$0xff]
  %v2065 = vld [vmem:[%s7 + $0xe0] sm:$0xff]
  %v2066 = vld [vmem:[%s7 + $0xe8] sm:$0xff]
  %v2067 = vld [vmem:[%s7 + $0xf0] sm:$0xff]
  %v2068 = vld [vmem:[%s7 + $0xf8] sm:$0xff]
  %v2069 = vld [vmem:[%s7 + $0x100] sm:$0xff]
  %v2070 = vld [vmem:[%s7 + $0x108] sm:$0xff]
  %v2071 = vld [vmem:[%s7 + $0x110] sm:$0xff]
  %v2072 = vld [vmem:[%s7 + $0x118] sm:$0xff]
  %v2073 = vld [vmem:[%s7 + $0x120] sm:$0xff]
  %v2074 = vld [vmem:[%s7 + $0x128] sm:$0xff]
  %v2075 = vld [vmem:[%s7 + $0x130] sm:$0xff]
  %v2076 = vld [vmem:[%s7 + $0x138] sm:$0xff]
  %v2077 = vld [vmem:[%s7 + $0x140] sm:$0xff]
  %v2078 = vld [vmem:[%s7 + $0x148] sm:$0xff]
  %v2079 = vld [vmem:[%s7 + $0x150] sm:$0xff]
  %v2080 = vld [vmem:[%s7 + $0x158] sm:$0xff]
  %v2081 = vld [vmem:[%s7 + $0x160] sm:$0xff]
  %v2082 = vld [vmem:[%s7 + $0x168] sm:$0xff]
  %v2083 = vld [vmem:[%s7 + $0x170] sm:$0xff]
  %v2084 = vld [vmem:[%s7 + $0x178] sm:$0xff]
  %v2085 = vld [vmem:[%s8] sm:$0x3f]
  %v2087 = vperm.slane %v2085, 0
  %v2088 = vperm.slane %v2085, 1
  %v2089 = vperm.slane %v2085, 2
  %v2090 = vperm.slane %v2085, 3
  %v2091 = vperm.slane %v2085, 4
  %v2092 = vperm.slane %v2085, 5
  %v2100 = vsel %vm172, %v2036, 0
  %2102 = vmatpush.msra.mxu0 0.0
  %2103 = vmatpush.msra.mxu0 0.0
  %2104 = vmatpush.msra.mxu0 0.0
  %2105 = vmatpush.msra.mxu0 0.0
  %2106 = vmatpush.msra.mxu0 0.0
  %2107 = vmatpush.msra.mxu0 0.0
  %2108 = vmatpush.msra.mxu0 0.0
  %2109 = vmatpush.msra.mxu0 0.0
  %2110 = vmatpush.msra.mxu0 %v2079
  %2111 = vmatpush.msra.mxu0 %v2073
  %2112 = vmatpush.msra.mxu0 %v2067
  %2113 = vmatpush.msra.mxu0 %v2061
  %2114 = vmatpush.msra.mxu0 %v2055
  %2115 = vmatpush.msra.mxu0 %v2049
  %2116 = vmatpush.msra.mxu0 %v2043
  %2117 = vmatpush.msra.mxu0 %v2037
  %2118 = vmatmul.f32.gmra.mxu0 %v2100
  %v2119 = vpop.f32.mrf.mxu0
  %v2120 = vadd.f32 %v2087, %v2119
  %2121 = vdwg.mxu0
  %2122 = vmatpush.msra.mxu0 0.0
  %2123 = vmatpush.msra.mxu0 0.0
  %2124 = vmatpush.msra.mxu0 0.0
  %2125 = vmatpush.msra.mxu0 0.0
  %2126 = vmatpush.msra.mxu0 0.0
  %2127 = vmatpush.msra.mxu0 0.0
  %2128 = vmatpush.msra.mxu0 0.0
  %2129 = vmatpush.msra.mxu0 0.0
  %2130 = vmatpush.msra.mxu0 %v2080
  %2131 = vmatpush.msra.mxu0 %v2074
  %2132 = vmatpush.msra.mxu0 %v2068
  %2133 = vmatpush.msra.mxu0 %v2062
  %2134 = vmatpush.msra.mxu0 %v2056
  %2135 = vmatpush.msra.mxu0 %v2050
  %2136 = vmatpush.msra.mxu0 %v2044
  %2137 = vmatpush.msra.mxu0 %v2038
  %2138 = vmatmul.f32.gmra.mxu0 %v2100
  %v2139 = vpop.f32.mrf.mxu0
  %v2140 = vadd.f32 %v2088, %v2139
  %2141 = vdwg.mxu0
  %2142 = vmatpush.msra.mxu0 0.0
  %2143 = vmatpush.msra.mxu0 0.0
  %2144 = vmatpush.msra.mxu0 0.0
  %2145 = vmatpush.msra.mxu0 0.0
  %2146 = vmatpush.msra.mxu0 0.0
  %2147 = vmatpush.msra.mxu0 0.0
  %2148 = vmatpush.msra.mxu0 0.0
  %2149 = vmatpush.msra.mxu0 0.0
  %2150 = vmatpush.msra.mxu0 %v2081
  %2151 = vmatpush.msra.mxu0 %v2075
  %2152 = vmatpush.msra.mxu0 %v2069
  %2153 = vmatpush.msra.mxu0 %v2063
  %2154 = vmatpush.msra.mxu0 %v2057
  %2155 = vmatpush.msra.mxu0 %v2051
  %2156 = vmatpush.msra.mxu0 %v2045
  %2157 = vmatpush.msra.mxu0 %v2039
  %2158 = vmatmul.f32.gmra.mxu0 %v2100
  %v2159 = vpop.f32.mrf.mxu0
  %v2160 = vadd.f32 %v2089, %v2159
  %2161 = vdwg.mxu0
  %2162 = vmatpush.msra.mxu0 0.0
  %2163 = vmatpush.msra.mxu0 0.0
  %2164 = vmatpush.msra.mxu0 0.0
  %2165 = vmatpush.msra.mxu0 0.0
  %2166 = vmatpush.msra.mxu0 0.0
  %2167 = vmatpush.msra.mxu0 0.0
  %2168 = vmatpush.msra.mxu0 0.0
  %2169 = vmatpush.msra.mxu0 0.0
  %2170 = vmatpush.msra.mxu0 %v2082
  %2171 = vmatpush.msra.mxu0 %v2076
  %2172 = vmatpush.msra.mxu0 %v2070
  %2173 = vmatpush.msra.mxu0 %v2064
  %2174 = vmatpush.msra.mxu0 %v2058
  %2175 = vmatpush.msra.mxu0 %v2052
  %2176 = vmatpush.msra.mxu0 %v2046
  %2177 = vmatpush.msra.mxu0 %v2040
  %2178 = vmatmul.f32.gmra.mxu0 %v2100
  %v2179 = vpop.f32.mrf.mxu0
  %v2180 = vadd.f32 %v2090, %v2179
  %2181 = vdwg.mxu0
  %2182 = vmatpush.msra.mxu0 0.0
  %2183 = vmatpush.msra.mxu0 0.0
  %2184 = vmatpush.msra.mxu0 0.0
  %2185 = vmatpush.msra.mxu0 0.0
  %2186 = vmatpush.msra.mxu0 0.0
  %2187 = vmatpush.msra.mxu0 0.0
  %2188 = vmatpush.msra.mxu0 0.0
  %2189 = vmatpush.msra.mxu0 0.0
  %2190 = vmatpush.msra.mxu0 %v2083
  %2191 = vmatpush.msra.mxu0 %v2077
  %2192 = vmatpush.msra.mxu0 %v2071
  %2193 = vmatpush.msra.mxu0 %v2065
  %2194 = vmatpush.msra.mxu0 %v2059
  %2195 = vmatpush.msra.mxu0 %v2053
  %2196 = vmatpush.msra.mxu0 %v2047
  %2197 = vmatpush.msra.mxu0 %v2041
  %2198 = vmatmul.f32.gmra.mxu0 %v2100
  %v2199 = vpop.f32.mrf.mxu0
  %v2200 = vadd.f32 %v2091, %v2199
  %2201 = vdwg.mxu0
  %2202 = vmatpush.msra.mxu0 0.0
  %2203 = vmatpush.msra.mxu0 0.0
  %2204 = vmatpush.msra.mxu0 0.0
  %2205 = vmatpush.msra.mxu0 0.0
  %2206 = vmatpush.msra.mxu0 0.0
  %2207 = vmatpush.msra.mxu0 0.0
  %2208 = vmatpush.msra.mxu0 0.0
  %2209 = vmatpush.msra.mxu0 0.0
  %2210 = vmatpush.msra.mxu0 %v2084
  %2211 = vmatpush.msra.mxu0 %v2078
  %2212 = vmatpush.msra.mxu0 %v2072
  %2213 = vmatpush.msra.mxu0 %v2066
  %2214 = vmatpush.msra.mxu0 %v2060
  %2215 = vmatpush.msra.mxu0 %v2054
  %2216 = vmatpush.msra.mxu0 %v2048
  %2217 = vmatpush.msra.mxu0 %v2042
  %2218 = vmatmul.f32.gmra.mxu0 %v2100
  %v2219 = vpop.f32.mrf.mxu0
  %v2220 = vadd.f32 %v2092, %v2219
  %2221 = vdwg.mxu0
  %v2222 = vmax.f32 %v2120, 0.0
  %v2223 = vmax.f32 %v2140, 0.0
  %v2224 = vmax.f32 %v2160, 0.0
  %v2225 = vmax.f32 %v2180, 0.0
  %v2226 = vmax.f32 %v2200, 0.0
  %v2227 = vmax.f32 %v2220, 0.0
  %v2228 = vld [vmem:[%s9] sm:$0xff]
  %v2229 = vld [vmem:[%s9 + $0x8] sm:$0xff]
  %v2230 = vld [vmem:[%s9 + $0x10] sm:$0xff]
  %v2231 = vld [vmem:[%s9 + $0x18] sm:$0xff]
  %v2232 = vld [vmem:[%s9 + $0x20] sm:$0xff]
  %v2233 = vld [vmem:[%s9 + $0x28] sm:$0xff]
  %v2234 = vld [vmem:[%s9 + $0x30] sm:$0xff]
  %v2235 = vld [vmem:[%s9 + $0x38] sm:$0xff]
  %v2236 = vld [vmem:[%s9 + $0x40] sm:$0xff]
  %v2237 = vld [vmem:[%s9 + $0x48] sm:$0xff]
  %v2238 = vld [vmem:[%s9 + $0x50] sm:$0xff]
  %v2239 = vld [vmem:[%s9 + $0x58] sm:$0xff]
  %v2240 = vld [vmem:[%s9 + $0x60] sm:$0xff]
  %v2241 = vld [vmem:[%s9 + $0x68] sm:$0xff]
  %v2242 = vld [vmem:[%s9 + $0x70] sm:$0xff]
  %v2243 = vld [vmem:[%s9 + $0x78] sm:$0xff]
  %v2244 = vld [vmem:[%s9 + $0x80] sm:$0xff]
  %v2245 = vld [vmem:[%s9 + $0x88] sm:$0xff]
  %v2246 = vld [vmem:[%s9 + $0x90] sm:$0xff]
  %v2247 = vld [vmem:[%s9 + $0x98] sm:$0xff]
  %v2248 = vld [vmem:[%s9 + $0xa0] sm:$0xff]
  %v2249 = vld [vmem:[%s9 + $0xa8] sm:$0xff]
  %v2250 = vld [vmem:[%s9 + $0xb0] sm:$0xff]
  %v2251 = vld [vmem:[%s9 + $0xb8] sm:$0xff]
  %v2252 = vld [vmem:[%s9 + $0xc0] sm:$0xff]
  %v2253 = vld [vmem:[%s9 + $0xc8] sm:$0xff]
  %v2254 = vld [vmem:[%s9 + $0xd0] sm:$0xff]
  %v2255 = vld [vmem:[%s9 + $0xd8] sm:$0xff]
  %v2256 = vld [vmem:[%s9 + $0xe0] sm:$0xff]
  %v2257 = vld [vmem:[%s9 + $0xe8] sm:$0xff]
  %v2258 = vld [vmem:[%s9 + $0xf0] sm:$0xff]
  %v2259 = vld [vmem:[%s9 + $0xf8] sm:$0xff]
  %v2260 = vld [vmem:[%s9 + $0x100] sm:$0xff]
  %v2261 = vld [vmem:[%s9 + $0x108] sm:$0xff]
  %v2262 = vld [vmem:[%s9 + $0x110] sm:$0xff]
  %v2263 = vld [vmem:[%s9 + $0x118] sm:$0xff]
  %v2264 = vld [vmem:[%s9 + $0x120] sm:$0xff]
  %v2265 = vld [vmem:[%s9 + $0x128] sm:$0xff]
  %v2266 = vld [vmem:[%s9 + $0x130] sm:$0xff]
  %v2267 = vld [vmem:[%s9 + $0x138] sm:$0xff]
  %v2268 = vld [vmem:[%s9 + $0x140] sm:$0xff]
  %v2269 = vld [vmem:[%s9 + $0x148] sm:$0xff]
  %v2270 = vld [vmem:[%s9 + $0x150] sm:$0xff]
  %v2271 = vld [vmem:[%s9 + $0x158] sm:$0xff]
  %v2272 = vld [vmem:[%s9 + $0x160] sm:$0xff]
  %v2273 = vld [vmem:[%s9 + $0x168] sm:$0xff]
  %v2274 = vld [vmem:[%s9 + $0x170] sm:$0xff]
  %v2275 = vld [vmem:[%s9 + $0x178] sm:$0xff]
  %v2276 = vld [vmem:[%s9 + $0x180] sm:$0xff]
  %v2277 = vld [vmem:[%s9 + $0x188] sm:$0xff]
  %v2278 = vld [vmem:[%s9 + $0x190] sm:$0xff]
  %v2279 = vld [vmem:[%s9 + $0x198] sm:$0xff]
  %v2280 = vld [vmem:[%s9 + $0x1a0] sm:$0xff]
  %v2281 = vld [vmem:[%s9 + $0x1a8] sm:$0xff]
  %v2282 = vld [vmem:[%s9 + $0x1b0] sm:$0xff]
  %v2283 = vld [vmem:[%s9 + $0x1b8] sm:$0xff]
  %v2284 = vld [vmem:[%s9 + $0x1c0] sm:$0xff]
  %v2285 = vld [vmem:[%s9 + $0x1c8] sm:$0xff]
  %v2286 = vld [vmem:[%s9 + $0x1d0] sm:$0xff]
  %v2287 = vld [vmem:[%s9 + $0x1d8] sm:$0xff]
  %v2288 = vld [vmem:[%s9 + $0x1e0] sm:$0xff]
  %v2289 = vld [vmem:[%s9 + $0x1e8] sm:$0xff]
  %v2290 = vld [vmem:[%s9 + $0x1f0] sm:$0xff]
  %v2291 = vld [vmem:[%s9 + $0x1f8] sm:$0xff]
  %v2292 = vld [vmem:[%s9 + $0x200] sm:$0xff]
  %v2293 = vld [vmem:[%s9 + $0x208] sm:$0xff]
  %v2294 = vld [vmem:[%s9 + $0x210] sm:$0xff]
  %v2295 = vld [vmem:[%s9 + $0x218] sm:$0xff]
  %v2296 = vld [vmem:[%s9 + $0x220] sm:$0xff]
  %v2297 = vld [vmem:[%s9 + $0x228] sm:$0xff]
  %v2298 = vld [vmem:[%s9 + $0x230] sm:$0xff]
  %v2299 = vld [vmem:[%s9 + $0x238] sm:$0xff]
  %v2300 = vld [vmem:[%s9 + $0x240] sm:$0xff]
  %v2301 = vld [vmem:[%s9 + $0x248] sm:$0xff]
  %v2302 = vld [vmem:[%s9 + $0x250] sm:$0xff]
  %v2303 = vld [vmem:[%s9 + $0x258] sm:$0xff]
  %v2304 = vld [vmem:[%s9 + $0x260] sm:$0xff]
  %v2305 = vld [vmem:[%s9 + $0x268] sm:$0xff]
  %v2306 = vld [vmem:[%s9 + $0x270] sm:$0xff]
  %v2307 = vld [vmem:[%s9 + $0x278] sm:$0xff]
  %v2308 = vld [vmem:[%s9 + $0x280] sm:$0xff]
  %v2309 = vld [vmem:[%s9 + $0x288] sm:$0xff]
  %v2310 = vld [vmem:[%s9 + $0x290] sm:$0xff]
  %v2311 = vld [vmem:[%s9 + $0x298] sm:$0xff]
  %v2312 = vld [vmem:[%s9 + $0x2a0] sm:$0xff]
  %v2313 = vld [vmem:[%s9 + $0x2a8] sm:$0xff]
  %v2314 = vld [vmem:[%s9 + $0x2b0] sm:$0xff]
  %v2315 = vld [vmem:[%s9 + $0x2b8] sm:$0xff]
  %v2316 = vld [vmem:[%s9 + $0x2c0] sm:$0xff]
  %v2317 = vld [vmem:[%s9 + $0x2c8] sm:$0xff]
  %v2318 = vld [vmem:[%s9 + $0x2d0] sm:$0xff]
  %v2319 = vld [vmem:[%s9 + $0x2d8] sm:$0xff]
  %v2320 = vld [vmem:[%s9 + $0x2e0] sm:$0xff]
  %v2321 = vld [vmem:[%s9 + $0x2e8] sm:$0xff]
  %v2322 = vld [vmem:[%s9 + $0x2f0] sm:$0xff]
  %v2323 = vld [vmem:[%s9 + $0x2f8] sm:$0xff]
  %v2324 = vld [vmem:[%s10] sm:$0x1]
  %v2326 = vperm.slane %v2324, 0
  %2328 = vmatpush.msra.mxu0 %v2243
  %2329 = vmatpush.msra.mxu0 %v2242
  %2330 = vmatpush.msra.mxu0 %v2241
  %2331 = vmatpush.msra.mxu0 %v2240
  %2332 = vmatpush.msra.mxu0 %v2239
  %2333 = vmatpush.msra.mxu0 %v2238
  %2334 = vmatpush.msra.mxu0 %v2237
  %2335 = vmatpush.msra.mxu0 %v2236
  %2336 = vmatpush.msra.mxu0 %v2235
  %2337 = vmatpush.msra.mxu0 %v2234
  %2338 = vmatpush.msra.mxu0 %v2233
  %2339 = vmatpush.msra.mxu0 %v2232
  %2340 = vmatpush.msra.mxu0 %v2231
  %2341 = vmatpush.msra.mxu0 %v2230
  %2342 = vmatpush.msra.mxu0 %v2229
  %2343 = vmatpush.msra.mxu0 %v2228
  %2344 = vmatmul.f32.gmra.mxu0 %v2222
  %v2345 = vpop.f32.mrf.mxu0
  %v2346 = vadd.f32 %v2326, %v2345
  %2347 = vdwg.mxu0
  %2348 = vmatpush.msra.mxu0 %v2259
  %2349 = vmatpush.msra.mxu0 %v2258
  %2350 = vmatpush.msra.mxu0 %v2257
  %2351 = vmatpush.msra.mxu0 %v2256
  %2352 = vmatpush.msra.mxu0 %v2255
  %2353 = vmatpush.msra.mxu0 %v2254
  %2354 = vmatpush.msra.mxu0 %v2253
  %2355 = vmatpush.msra.mxu0 %v2252
  %2356 = vmatpush.msra.mxu0 %v2251
  %2357 = vmatpush.msra.mxu0 %v2250
  %2358 = vmatpush.msra.mxu0 %v2249
  %2359 = vmatpush.msra.mxu0 %v2248
  %2360 = vmatpush.msra.mxu0 %v2247
  %2361 = vmatpush.msra.mxu0 %v2246
  %2362 = vmatpush.msra.mxu0 %v2245
  %2363 = vmatpush.msra.mxu0 %v2244
  %2364 = vmatmul.f32.gmra.mxu0 %v2223
  %v2365 = vpop.f32.mrf.mxu0
  %v2366 = vadd.f32 %v2346, %v2365
  %2367 = vdwg.mxu0
  %2368 = vmatpush.msra.mxu0 %v2275
  %2369 = vmatpush.msra.mxu0 %v2274
  %2370 = vmatpush.msra.mxu0 %v2273
  %2371 = vmatpush.msra.mxu0 %v2272
  %2372 = vmatpush.msra.mxu0 %v2271
  %2373 = vmatpush.msra.mxu0 %v2270
  %2374 = vmatpush.msra.mxu0 %v2269
  %2375 = vmatpush.msra.mxu0 %v2268
  %2376 = vmatpush.msra.mxu0 %v2267
  %2377 = vmatpush.msra.mxu0 %v2266
  %2378 = vmatpush.msra.mxu0 %v2265
  %2379 = vmatpush.msra.mxu0 %v2264
  %2380 = vmatpush.msra.mxu0 %v2263
  %2381 = vmatpush.msra.mxu0 %v2262
  %2382 = vmatpush.msra.mxu0 %v2261
  %2383 = vmatpush.msra.mxu0 %v2260
  %2384 = vmatmul.f32.gmra.mxu0 %v2224
  %v2385 = vpop.f32.mrf.mxu0
  %v2386 = vadd.f32 %v2366, %v2385
  %2387 = vdwg.mxu0
  %2388 = vmatpush.msra.mxu0 %v2291
  %2389 = vmatpush.msra.mxu0 %v2290
  %2390 = vmatpush.msra.mxu0 %v2289
  %2391 = vmatpush.msra.mxu0 %v2288
  %2392 = vmatpush.msra.mxu0 %v2287
  %2393 = vmatpush.msra.mxu0 %v2286
  %2394 = vmatpush.msra.mxu0 %v2285
  %2395 = vmatpush.msra.mxu0 %v2284
  %2396 = vmatpush.msra.mxu0 %v2283
  %2397 = vmatpush.msra.mxu0 %v2282
  %2398 = vmatpush.msra.mxu0 %v2281
  %2399 = vmatpush.msra.mxu0 %v2280
  %2400 = vmatpush.msra.mxu0 %v2279
  %2401 = vmatpush.msra.mxu0 %v2278
  %2402 = vmatpush.msra.mxu0 %v2277
  %2403 = vmatpush.msra.mxu0 %v2276
  %2404 = vmatmul.f32.gmra.mxu0 %v2225
  %v2405 = vpop.f32.mrf.mxu0
  %v2406 = vadd.f32 %v2386, %v2405
  %2407 = vdwg.mxu0
  %2408 = vmatpush.msra.mxu0 %v2307
  %2409 = vmatpush.msra.mxu0 %v2306
  %2410 = vmatpush.msra.mxu0 %v2305
  %2411 = vmatpush.msra.mxu0 %v2304
  %2412 = vmatpush.msra.mxu0 %v2303
  %2413 = vmatpush.msra.mxu0 %v2302
  %2414 = vmatpush.msra.mxu0 %v2301
  %2415 = vmatpush.msra.mxu0 %v2300
  %2416 = vmatpush.msra.mxu0 %v2299
  %2417 = vmatpush.msra.mxu0 %v2298
  %2418 = vmatpush.msra.mxu0 %v2297
  %2419 = vmatpush.msra.mxu0 %v2296
  %2420 = vmatpush.msra.mxu0 %v2295
  %2421 = vmatpush.msra.mxu0 %v2294
  %2422 = vmatpush.msra.mxu0 %v2293
  %2423 = vmatpush.msra.mxu0 %v2292
  %2424 = vmatmul.f32.gmra.mxu0 %v2226
  %v2425 = vpop.f32.mrf.mxu0
  %v2426 = vadd.f32 %v2406, %v2425
  %2427 = vdwg.mxu0
  %2428 = vmatpush.msra.mxu0 %v2323
  %2429 = vmatpush.msra.mxu0 %v2322
  %2430 = vmatpush.msra.mxu0 %v2321
  %2431 = vmatpush.msra.mxu0 %v2320
  %2432 = vmatpush.msra.mxu0 %v2319
  %2433 = vmatpush.msra.mxu0 %v2318
  %2434 = vmatpush.msra.mxu0 %v2317
  %2435 = vmatpush.msra.mxu0 %v2316
  %2436 = vmatpush.msra.mxu0 %v2315
  %2437 = vmatpush.msra.mxu0 %v2314
  %2438 = vmatpush.msra.mxu0 %v2313
  %2439 = vmatpush.msra.mxu0 %v2312
  %2440 = vmatpush.msra.mxu0 %v2311
  %2441 = vmatpush.msra.mxu0 %v2310
  %2442 = vmatpush.msra.mxu0 %v2309
  %2443 = vmatpush.msra.mxu0 %v2308
  %2444 = vmatmul.f32.gmra.mxu0 %v2227
  %v2445 = vpop.f32.mrf.mxu0
  %v2446 = vadd.f32 %v2426, %v2445
  %2447 = vdwg.mxu0
  %vm2448 = vcmask 58368
  %2449 = vst.msk [vmem:[%s11] sm:$0x3] %vm2448, %v2446
  // Predicated region
  $region46: #{forward.1} parent=0 // pred_check
    _
  $region47: #{forward.1} parent=0 // pred_check_branch
    %2451 = sbr.rel (0) target = $region49
  $region48: #{forward.1} parent=0 // pred_region
    _
  $region49: #{forward.1} parent=0 // pred_fallthru
    _
  // Predicated region
  $region50: #{forward.1} parent=0 // pred_check
    _
  $region51: #{forward.1} parent=0 // pred_check_branch
    %2453 = sbr.rel (0) target = $region53
  $region52: #{forward.1} parent=0 // pred_region
    _
  $region53: #{forward.1} parent=0 // pred_fallthru
    _

</llo_original>
